<compile_context>
chip_gen: v7x
topology: tpu7x:2x2x1
jax: 0.10.0
libtpu: 0.0.40
codegen_flags: <defaults>
</compile_context>

<pallas_src>
import functools

import jax
import jax.numpy as jnp
from jax.experimental import pallas as pl
from jax.experimental.pallas import tpu as pltpu


DIM = 128          # "dim" in the PyTorch module
OUT_DIM = 8        # final head output (position 3 + rotation 4 + gripper 1)
PAD_OUT = 128      # lane-dense padded head width
DROP_P = 0.2


def _round_up(x, m):
    return (x + m - 1) // m * m


def bc_forward_kernel(scalars_ref,                    # SMEM: [n_valid, seed]
                      obs_ref, act_ref,
                      w1_ref, b1_ref, w2_ref, b2_ref,
                      w3_ref, b3_ref, w4_ref, b4_ref,
                      pred_ref, psum_ref,
                      *, training: bool, drop_p: float, ew_dtype):
    tb = pred_ref.shape[0]

    if training:
        seed = scalars_ref[1]
        drop_thr = jnp.int32(int(drop_p * (2 ** 31)))
        row0 = pl.program_id(0) * tb          # global row offset of this tile

    def _mish(x):
        # mish(x) = x * t/(t+2), t = e^x (e^x + 2).  Past the clip the ratio is
        # exactly 1 in f32/bf16, so no identity branch is needed.
        u = jnp.exp(jnp.minimum(x, 20.0))
        t = u * (u + 2.0)
        if x.dtype == jnp.float32:
            return x * t * pl.reciprocal(t + 2.0, approx=True)   # EUP rcp (v5e path)
        return x * (t / (t + 2.0))                               # bf16 path (v6e/v7x)

    def _dropout(v, salt):
        # TODO(synk): matches PyTorch dropout *semantics* (Bernoulli keep); the
        # RNG stream is a portable counter hash, not PyTorch's (and not the TPU
        # HW PRNG, which has no interpret-mode lowering).  1/(1-p) scale is
        # folded into the next Linear's weights in the wrapper.
        r = jax.lax.broadcasted_iota(jnp.int32, v.shape, 0)
        c = jax.lax.broadcasted_iota(jnp.int32, v.shape, 1)
        x = (row0 + r) * jnp.int32(v.shape[1]) + c
        x = x ^ (seed * jnp.int32(0x3504F333) + jnp.int32(salt))
        x = (x ^ jax.lax.shift_right_logical(x, 16)) * jnp.int32(0x7FEB352D)
        x = (x ^ jax.lax.shift_right_logical(x, 15)) * jnp.int32(-2073319797)  # 0x846CA68B
        x = x ^ jax.lax.shift_right_logical(x, 16)
        keep = (x & jnp.int32(0x7FFFFFFF)) >= drop_thr
        return jnp.where(keep, v, jnp.zeros_like(v))

    def epilogue(v_f32, salt):
        # elementwise work in ew_dtype (bf16 on v6e/v7x, f32 on v5e); the result
        # feeds the next MXU matmul as bf16 either way.
        x = _mish(v_f32.astype(ew_dtype))
        if training:
            x = _dropout(x, salt)
        return x.astype(jnp.bfloat16)

    # base: Linear -> Mish -> Dropout -> Linear -> Mish -> Dropout -> Linear
    x = obs_ref[...]                                             # bf16 (TB, cond)
    h = jnp.dot(x, w1_ref[...], preferred_element_type=jnp.float32) + b1_ref[...]
    h = epilogue(h, 0x243F6A88)
    h = jnp.dot(h, w2_ref[...], preferred_element_type=jnp.float32) + b2_ref[...]
    h = epilogue(h, 0x13198A2E)
    h = jnp.dot(h, w3_ref[...], preferred_element_type=jnp.float32) + b3_ref[...]

    # final: Mish -> Linear (head zero-padded to 128 lanes)
    h = _mish(h.astype(ew_dtype)).astype(jnp.bfloat16)
    pred = jnp.dot(h, w4_ref[...], preferred_element_type=jnp.float32) + b4_ref[...]
    pred_ref[...] = pred.astype(pred_ref.dtype)                  # lane-dense bf16 store

    # per-tile partial sums of squared error over *valid* rows only.
    # Padded head columns contribute 0 because w4/b4/act are zero-padded there.
    n_valid = scalars_ref[0]
    grow = pl.program_id(0) * tb + jax.lax.broadcasted_iota(jnp.int32, pred.shape, 0)
    diff = pred - act_ref[...].astype(jnp.float32)
    sq = jnp.where(grow < n_valid, diff * diff, 0.0)
    s = jnp.sum(sq, axis=0, keepdims=True)                       # (1, 128)
    rowsel = jax.lax.broadcasted_iota(jnp.int32, psum_ref.shape, 0) == 0
    psum_ref[...] = jnp.where(rowsel, s, 0.0)                    # row 0 holds the sum


def bc_forward(obs, act, params, *, seed=0, training=False, tb=512,
               elementwise_dtype=jnp.bfloat16):
    """obs: (B, cond_dim) f32, act: (B, 1, 8) f32. Returns (loss dict, pred (B,1,8)).

    elementwise_dtype: jnp.bfloat16 for v6e/v7x (bf16 VPU/EUP), jnp.float32 for v5e.
    """
    w1, b1, w2, b2, w3, b3, w4, b4 = params
    B, cond_dim = obs.shape

    # Batch tiling: TB is a multiple of 16 (bf16 sublane packing) and chosen so
    # that large batches split into >=2 tiles -> both v7x TensorCores are used;
    # tb bounds the VMEM footprint (sweepable, 512-1024 is near roofline).
    TB = max(16, min(tb, _round_up(pl.cdiv(B, 2), 16)))
    B_pad = _round_up(B, TB)
    n_tiles = B_pad // TB

    # Inputs: obs + act in bf16 (act is 16x lane-padded -> halve its DMA).
    obs_p = jnp.zeros((B_pad, cond_dim), jnp.bfloat16).at[:B].set(obs.astype(jnp.bfloat16))
    act2d = act.reshape(B, OUT_DIM)
    act_p = jnp.zeros((B_pad, PAD_OUT), jnp.bfloat16).at[:B, :OUT_DIM].set(
        act2d.astype(jnp.bfloat16))

    # Head padded to lane width (zero columns -> zero pred/diff there).
    w4_p = jnp.zeros((DIM, PAD_OUT), jnp.float32).at[:, :OUT_DIM].set(w4)
    b4_p = jnp.zeros((1, PAD_OUT), jnp.float32).at[:, :OUT_DIM].set(b4.reshape(1, OUT_DIM))

    # Fold the dropout 1/(1-p) scale into the weights that consume the dropped
    # activations (mathematically identical; removes one mul/elem in-kernel).
    keep_scale = 1.0 / (1.0 - DROP_P)
    w2_eff = w2 * keep_scale if training else w2
    w3_eff = w3 * keep_scale if training else w3

    wb = (w1.astype(jnp.bfloat16), b1.reshape(1, -1).astype(jnp.float32),
          w2_eff.astype(jnp.bfloat16), b2.reshape(1, -1).astype(jnp.float32),
          w3_eff.astype(jnp.bfloat16), b3.reshape(1, -1).astype(jnp.float32),
          w4_p.astype(jnp.bfloat16), b4_p)

    scalars = jnp.asarray([B, seed], dtype=jnp.int32)

    def const_spec(shape):
        # weights/biases: same block for every grid step -> stay VMEM-resident
        return pl.BlockSpec(shape, lambda i, s: (0, 0))

    grid_spec = pltpu.PrefetchScalarGridSpec(
        num_scalar_prefetch=1,
        grid=(n_tiles,),
        in_specs=[
            pl.BlockSpec((TB, cond_dim), lambda i, s: (i, 0)),   # obs tile
            pl.BlockSpec((TB, PAD_OUT), lambda i, s: (i, 0)),    # act tile (bf16)
            const_spec(wb[0].shape), const_spec(wb[1].shape),
            const_spec(wb[2].shape), const_spec(wb[3].shape),
            const_spec(wb[4].shape), const_spec(wb[5].shape),
            const_spec(wb[6].shape), const_spec(wb[7].shape),
        ],
        out_specs=(
            pl.BlockSpec((TB, PAD_OUT), lambda i, s: (i, 0)),    # pred (lane-dense bf16)
            pl.BlockSpec((8, PAD_OUT), lambda i, s: (i, 0)),     # loss partial sums
        ),
    )

    pred_p, psum = pl.pallas_call(
        functools.partial(bc_forward_kernel, training=training,
                          drop_p=DROP_P, ew_dtype=elementwise_dtype),
        grid_spec=grid_spec,
        out_shape=(
            jax.ShapeDtypeStruct((B_pad, PAD_OUT), jnp.bfloat16),
            jax.ShapeDtypeStruct((n_tiles * 8, PAD_OUT), jnp.float32),
        ),
        compiler_params=pltpu.CompilerParams(
            dimension_semantics=("parallel",),                   # megacore on v7x
            vmem_limit_bytes=48 * 1024 * 1024),                  # headroom for TB>=512 on v5e
    )(scalars, obs_p, act_p, *wb)

    # finish the (tiny) loss reduction in the wrapper so the batch axis stays parallel
    row = jnp.sum(psum, axis=0)                                  # (128,) total sq error
    position = jnp.sum(row[:3]) / (B * 3) * 30.0
    rotation = jnp.sum(row[3:7]) / (B * 4) * 3.0
    gripper = row[7] / B
    total = (position + rotation + gripper) / 30.0

    loss_dict = {
        "position": position,
        "rotation": rotation,
        "gripper": gripper,
        "total_loss": total,
    }
    pred = pred_p[:B, :OUT_DIM].astype(jnp.float32)[:, None, :]  # (B, 1, 8), like the module
    return loss_dict, pred


def _ref_forward(obs, act, params):
    """Pure-JAX reference (eval mode) with matching bf16 matmul numerics."""
    w1, b1, w2, b2, w3, b3, w4, b4 = params
    mish = lambda v: v * jnp.tanh(jax.nn.softplus(v))

    def lin(x, w, b):
        return jnp.dot(x.astype(jnp.bfloat16), w.astype(jnp.bfloat16),
                       preferred_element_type=jnp.float32) + b.reshape(1, -1)

    h = mish(lin(obs, w1, b1))
    h = mish(lin(h, w2, b2))
    h = mish(lin(h, w3, b3))
    pred = lin(h, w4, b4)[:, None, :]
    act = act.astype(jnp.float32)
    position = jnp.mean((pred[:, :, :3] - act[:, :, :3]) ** 2) * 30.0
    rotation = jnp.mean((pred[:, :, 3:7] - act[:, :, 3:7]) ** 2) * 3.0
    gripper = jnp.mean((pred[:, :, 7:8] - act[:, :, 7:8]) ** 2)
    total = (position + rotation + gripper) / 30.0
    return {"position": position, "rotation": rotation,
            "gripper": gripper, "total_loss": total}, pred


def make_params(key, cond_dim):
    ks = jax.random.split(key, 8)
    scale = 0.05
    w1 = scale * jax.random.normal(ks[0], (cond_dim, DIM * 8), jnp.float32)
    b1 = scale * jax.random.normal(ks[1], (1, DIM * 8), jnp.float32)
    w2 = scale * jax.random.normal(ks[2], (DIM * 8, DIM * 4), jnp.float32)
    b2 = scale * jax.random.normal(ks[3], (1, DIM * 4), jnp.float32)
    w3 = scale * jax.random.normal(ks[4], (DIM * 4, DIM), jnp.float32)
    b3 = scale * jax.random.normal(ks[5], (1, DIM), jnp.float32)
    w4 = scale * jax.random.normal(ks[6], (DIM, OUT_DIM), jnp.float32)
    b4 = scale * jax.random.normal(ks[7], (1, OUT_DIM), jnp.float32)
    return (w1, b1, w2, b2, w3, b3, w4, b4)


if __name__ == "__main__":
    key = jax.random.PRNGKey(0)
    k_obs, k_act, k_par = jax.random.split(key, 3)

    B = 4
    COND_DIM = 32          # obs feature dim
    TRANSITION_DIM = 8     # act last dim

    obs = jax.random.normal(k_obs, (B, COND_DIM), jnp.float32)
    act = jax.random.normal(k_act, (B, 1, TRANSITION_DIM), jnp.float32)
    params = make_params(k_par, COND_DIM)

    ref_losses, ref_pred = _ref_forward(obs, act, params)

    # eval mode, bf16 elementwise path (default, v6e/v7x)
    losses, pred = bc_forward(obs, act, params, training=False)
    jax.block_until_ready(losses["total_loss"])
    for name in ("position", "rotation", "gripper", "total_loss"):
        assert jnp.allclose(losses[name], ref_losses[name], rtol=3e-2, atol=1e-2), (
            name, float(losses[name]), float(ref_losses[name]))
    assert jnp.allclose(pred, ref_pred, rtol=3e-2, atol=1e-2)

    # eval mode, f32 elementwise path (v5e)
    losses32, pred32 = bc_forward(obs, act, params, training=False,
                                  elementwise_dtype=jnp.float32)
    jax.block_until_ready(losses32["total_loss"])
    for name in ("position", "rotation", "gripper", "total_loss"):
        assert jnp.allclose(losses32[name], ref_losses[name], rtol=2e-2, atol=5e-3), (
            name, float(losses32[name]), float(ref_losses[name]))
    assert jnp.allclose(pred32, ref_pred, rtol=2e-2, atol=5e-3)

    # training mode: exercise the dropout path once (sanity: finite outputs)
    tr_losses, tr_pred = bc_forward(obs, act, params, seed=1234, training=True)
    jax.block_until_ready(tr_losses["total_loss"])
    assert bool(jnp.isfinite(tr_losses["total_loss"]))
    assert bool(jnp.all(jnp.isfinite(tr_pred)))

    print("KERNEL_OK")
</pallas_src>

<mosaic_0001>
module attributes {stable_mosaic.version = 11 : i64} {
  func.func @bc_forward_kernel(%arg0: i32, %arg1: memref<2xi32, #tpu.memory_space<smem>>, %arg2: memref<16x32xbf16, #tpu.memory_space<vmem>>, %arg3: memref<16x128xbf16, #tpu.memory_space<vmem>>, %arg4: memref<32x1024xbf16, #tpu.memory_space<vmem>>, %arg5: memref<1x1024xf32, #tpu.memory_space<vmem>>, %arg6: memref<1024x512xbf16, #tpu.memory_space<vmem>>, %arg7: memref<1x512xf32, #tpu.memory_space<vmem>>, %arg8: memref<512x128xbf16, #tpu.memory_space<vmem>>, %arg9: memref<1x128xf32, #tpu.memory_space<vmem>>, %arg10: memref<128x128xbf16, #tpu.memory_space<vmem>>, %arg11: memref<1x128xf32, #tpu.memory_space<vmem>>, %arg12: memref<16x128xbf16, #tpu.memory_space<vmem>>, %arg13: memref<8x128xf32, #tpu.memory_space<vmem>>) attributes {dimension_semantics = [#tpu.dimension_semantics<parallel>], iteration_bounds = array<i64: 1>, scalar_prefetch = 1 : i64, scratch_operands = 0 : i64, tpu.core_type = #tpu.core_type<tc>, window_params = [{transform_indices = @transform_0, window_bounds = array<i64: 16, 32>}, {transform_indices = @transform_1, window_bounds = array<i64: 16, 128>}, {pipeline_mode = #tpu.pipeline_mode<synchronous>, transform_indices = @transform_2, window_bounds = array<i64: 32, 1024>}, {pipeline_mode = #tpu.pipeline_mode<synchronous>, transform_indices = @transform_3, window_bounds = array<i64: 1, 1024>}, {pipeline_mode = #tpu.pipeline_mode<synchronous>, transform_indices = @transform_4, window_bounds = array<i64: 1024, 512>}, {pipeline_mode = #tpu.pipeline_mode<synchronous>, transform_indices = @transform_5, window_bounds = array<i64: 1, 512>}, {pipeline_mode = #tpu.pipeline_mode<synchronous>, transform_indices = @transform_6, window_bounds = array<i64: 512, 128>}, {pipeline_mode = #tpu.pipeline_mode<synchronous>, transform_indices = @transform_7, window_bounds = array<i64: 1, 128>}, {pipeline_mode = #tpu.pipeline_mode<synchronous>, transform_indices = @transform_8, window_bounds = array<i64: 128, 128>}, {pipeline_mode = #tpu.pipeline_mode<synchronous>, transform_indices = @transform_9, window_bounds = array<i64: 1, 128>}, {transform_indices = @transform_10, window_bounds = array<i64: 16, 128>}, {transform_indices = @transform_11, window_bounds = array<i64: 8, 128>}]} {
    %c0 = arith.constant 0 : index
    %c0_0 = arith.constant 0 : index
    %0 = vector.load %arg2[%c0, %c0_0] : memref<16x32xbf16, #tpu.memory_space<vmem>>, vector<16x32xbf16>
    %c0_1 = arith.constant 0 : index
    %c0_2 = arith.constant 0 : index
    %1 = vector.load %arg4[%c0_1, %c0_2] : memref<32x1024xbf16, #tpu.memory_space<vmem>>, vector<32x1024xbf16>
    %cst = arith.constant dense<0.000000e+00> : vector<16x1024xf32>
    %2 = tpu.matmul %0, %1, %cst {dimension_numbers = #tpu.dot_dimension_numbers<[1], [0], [0], [1], [0, 0, 1, 1], [], []>} : vector<16x32xbf16>, vector<32x1024xbf16>, vector<16x1024xf32> -> vector<16x1024xf32>
    %c0_3 = arith.constant 0 : index
    %c0_4 = arith.constant 0 : index
    %3 = vector.load %arg5[%c0_3, %c0_4] : memref<1x1024xf32, #tpu.memory_space<vmem>>, vector<1x1024xf32>
    %4 = vector.broadcast %3 : vector<1x1024xf32> to vector<16x1024xf32>
    %5 = arith.addf %2, %4 : vector<16x1024xf32>
    %6 = arith.truncf %5 : vector<16x1024xf32> to vector<16x1024xbf16>
    %cst_5 = arith.constant 2.000000e+01 : bf16
    %7 = vector.broadcast %cst_5 : bf16 to vector<16x1024xbf16>
    %8 = arith.minimumf %6, %7 : vector<16x1024xbf16>
    %9 = math.exp %8 : vector<16x1024xbf16>
    %cst_6 = arith.constant 2.000000e+00 : bf16
    %10 = vector.broadcast %cst_6 : bf16 to vector<16x1024xbf16>
    %11 = arith.addf %9, %10 : vector<16x1024xbf16>
    %12 = arith.mulf %9, %11 : vector<16x1024xbf16>
    %cst_7 = arith.constant 2.000000e+00 : bf16
    %13 = vector.broadcast %cst_7 : bf16 to vector<16x1024xbf16>
    %14 = arith.addf %12, %13 : vector<16x1024xbf16>
    %15 = arith.divf %12, %14 : vector<16x1024xbf16>
    %16 = arith.mulf %6, %15 : vector<16x1024xbf16>
    %c0_8 = arith.constant 0 : index
    %c0_9 = arith.constant 0 : index
    %17 = vector.load %arg6[%c0_8, %c0_9] : memref<1024x512xbf16, #tpu.memory_space<vmem>>, vector<1024x512xbf16>
    %cst_10 = arith.constant dense<0.000000e+00> : vector<16x512xf32>
    %18 = tpu.matmul %16, %17, %cst_10 {dimension_numbers = #tpu.dot_dimension_numbers<[1], [0], [0], [1], [0, 0, 1, 1], [], []>} : vector<16x1024xbf16>, vector<1024x512xbf16>, vector<16x512xf32> -> vector<16x512xf32>
    %c0_11 = arith.constant 0 : index
    %c0_12 = arith.constant 0 : index
    %19 = vector.load %arg7[%c0_11, %c0_12] : memref<1x512xf32, #tpu.memory_space<vmem>>, vector<1x512xf32>
    %20 = vector.broadcast %19 : vector<1x512xf32> to vector<16x512xf32>
    %21 = arith.addf %18, %20 : vector<16x512xf32>
    %22 = arith.truncf %21 : vector<16x512xf32> to vector<16x512xbf16>
    %cst_13 = arith.constant 2.000000e+01 : bf16
    %23 = vector.broadcast %cst_13 : bf16 to vector<16x512xbf16>
    %24 = arith.minimumf %22, %23 : vector<16x512xbf16>
    %25 = math.exp %24 : vector<16x512xbf16>
    %cst_14 = arith.constant 2.000000e+00 : bf16
    %26 = vector.broadcast %cst_14 : bf16 to vector<16x512xbf16>
    %27 = arith.addf %25, %26 : vector<16x512xbf16>
    %28 = arith.mulf %25, %27 : vector<16x512xbf16>
    %cst_15 = arith.constant 2.000000e+00 : bf16
    %29 = vector.broadcast %cst_15 : bf16 to vector<16x512xbf16>
    %30 = arith.addf %28, %29 : vector<16x512xbf16>
    %31 = arith.divf %28, %30 : vector<16x512xbf16>
    %32 = arith.mulf %22, %31 : vector<16x512xbf16>
    %c0_16 = arith.constant 0 : index
    %c0_17 = arith.constant 0 : index
    %33 = vector.load %arg8[%c0_16, %c0_17] : memref<512x128xbf16, #tpu.memory_space<vmem>>, vector<512x128xbf16>
    %cst_18 = arith.constant dense<0.000000e+00> : vector<16x128xf32>
    %34 = tpu.matmul %32, %33, %cst_18 {dimension_numbers = #tpu.dot_dimension_numbers<[1], [0], [0], [1], [0, 0, 1, 1], [], []>} : vector<16x512xbf16>, vector<512x128xbf16>, vector<16x128xf32> -> vector<16x128xf32>
    %c0_19 = arith.constant 0 : index
    %c0_20 = arith.constant 0 : index
    %35 = vector.load %arg9[%c0_19, %c0_20] : memref<1x128xf32, #tpu.memory_space<vmem>>, vector<1x128xf32>
    %36 = vector.broadcast %35 : vector<1x128xf32> to vector<16x128xf32>
    %37 = arith.addf %34, %36 : vector<16x128xf32>
    %38 = arith.truncf %37 : vector<16x128xf32> to vector<16x128xbf16>
    %cst_21 = arith.constant 2.000000e+01 : bf16
    %39 = vector.broadcast %cst_21 : bf16 to vector<16x128xbf16>
    %40 = arith.minimumf %38, %39 : vector<16x128xbf16>
    %41 = math.exp %40 : vector<16x128xbf16>
    %cst_22 = arith.constant 2.000000e+00 : bf16
    %42 = vector.broadcast %cst_22 : bf16 to vector<16x128xbf16>
    %43 = arith.addf %41, %42 : vector<16x128xbf16>
    %44 = arith.mulf %41, %43 : vector<16x128xbf16>
    %cst_23 = arith.constant 2.000000e+00 : bf16
    %45 = vector.broadcast %cst_23 : bf16 to vector<16x128xbf16>
    %46 = arith.addf %44, %45 : vector<16x128xbf16>
    %47 = arith.divf %44, %46 : vector<16x128xbf16>
    %48 = arith.mulf %38, %47 : vector<16x128xbf16>
    %c0_24 = arith.constant 0 : index
    %c0_25 = arith.constant 0 : index
    %49 = vector.load %arg10[%c0_24, %c0_25] : memref<128x128xbf16, #tpu.memory_space<vmem>>, vector<128x128xbf16>
    %cst_26 = arith.constant dense<0.000000e+00> : vector<16x128xf32>
    %50 = tpu.matmul %48, %49, %cst_26 {dimension_numbers = #tpu.dot_dimension_numbers<[1], [0], [0], [1], [0, 0, 1, 1], [], []>} : vector<16x128xbf16>, vector<128x128xbf16>, vector<16x128xf32> -> vector<16x128xf32>
    %c0_27 = arith.constant 0 : index
    %c0_28 = arith.constant 0 : index
    %51 = vector.load %arg11[%c0_27, %c0_28] : memref<1x128xf32, #tpu.memory_space<vmem>>, vector<1x128xf32>
    %52 = vector.broadcast %51 : vector<1x128xf32> to vector<16x128xf32>
    %53 = arith.addf %50, %52 : vector<16x128xf32>
    %54 = arith.truncf %53 : vector<16x128xf32> to vector<16x128xbf16>
    %c0_29 = arith.constant 0 : index
    %c0_30 = arith.constant 0 : index
    %55 = vector.load %arg12[%c0_29, %c0_30] : memref<16x128xbf16, #tpu.memory_space<vmem>>, vector<16x128xbf16>
    tpu.vector_store %arg12[%c0_29, %c0_30], %54 {strides = array<i32>} : memref<16x128xbf16, #tpu.memory_space<vmem>>, vector<16x128xbf16>,
    %c0_31 = arith.constant 0 : index
    %56 = memref.load %arg1[%c0_31] : memref<2xi32, #tpu.memory_space<smem>>
    %c16_i32 = arith.constant 16 : i32
    %57 = arith.muli %arg0, %c16_i32 : i32
    %58 = tpu.iota {dimensions = array<i32: 0>} : vector<16x128xi32>
    %59 = vector.broadcast %57 : i32 to vector<16x128xi32>
    %60 = arith.addi %59, %58 : vector<16x128xi32>
    %c0_32 = arith.constant 0 : index
    %c0_33 = arith.constant 0 : index
    %61 = vector.load %arg3[%c0_32, %c0_33] : memref<16x128xbf16, #tpu.memory_space<vmem>>, vector<16x128xbf16>
    %62 = arith.extf %61 : vector<16x128xbf16> to vector<16x128xf32>
    %63 = arith.subf %53, %62 : vector<16x128xf32>
    %64 = vector.broadcast %56 : i32 to vector<16x128xi32>
    %65 = arith.cmpi slt, %60, %64 : vector<16x128xi32>
    %66 = arith.mulf %63, %63 : vector<16x128xf32>
    %cst_34 = arith.constant 0.000000e+00 : f32
    %67 = vector.broadcast %cst_34 : f32 to vector<16x128xf32>
    %68 = arith.select %65, %66, %67 : vector<16x128xi1>, vector<16x128xf32>
    %cst_35 = arith.constant dense<0.000000e+00> : vector<128xf32>
    %69 = vector.multi_reduction <add>, %68, %cst_35 [0] : vector<16x128xf32> to vector<128xf32>
    %70 = vector.shape_cast %69 : vector<128xf32> to vector<1x128xf32>
    %71 = tpu.iota {dimensions = array<i32: 0>} : vector<8x128xi32>
    %c0_i32 = arith.constant 0 : i32
    %72 = vector.broadcast %c0_i32 : i32 to vector<8x128xi32>
    %73 = arith.cmpi eq, %71, %72 : vector<8x128xi32>
    %cst_36 = arith.constant 0.000000e+00 : f32
    %74 = vector.shape_cast %70 : vector<1x128xf32> to vector<1x128xf32>
    %75 = vector.broadcast %74 : vector<1x128xf32> to vector<8x128xf32>
    %76 = vector.broadcast %cst_36 : f32 to vector<8x128xf32>
    %77 = arith.select %73, %75, %76 : vector<8x128xi1>, vector<8x128xf32>
    %c0_37 = arith.constant 0 : index
    %c0_38 = arith.constant 0 : index
    %78 = vector.load %arg13[%c0_37, %c0_38] : memref<8x128xf32, #tpu.memory_space<vmem>>, vector<8x128xf32>
    tpu.vector_store %arg13[%c0_37, %c0_38], %77 {strides = array<i32>} : memref<8x128xf32, #tpu.memory_space<vmem>>, vector<8x128xf32>,
    return
  }
  func.func @transform_0(%arg0: i32, %arg1: memref<2xi32, #tpu.memory_space<smem>>) -> (i32, i32) {
    %c0_i32 = arith.constant 0 : i32
    %c0_i32_0 = arith.constant 0 : i32
    return %arg0, %c0_i32 : i32, i32
  }
  func.func @transform_1(%arg0: i32, %arg1: memref<2xi32, #tpu.memory_space<smem>>) -> (i32, i32) {
    %c0_i32 = arith.constant 0 : i32
    %c0_i32_0 = arith.constant 0 : i32
    return %arg0, %c0_i32 : i32, i32
  }
  func.func @transform_2(%arg0: i32, %arg1: memref<2xi32, #tpu.memory_space<smem>>) -> (i32, i32) {
    %c0_i32 = arith.constant 0 : i32
    %c0_i32_0 = arith.constant 0 : i32
    %c0_i32_1 = arith.constant 0 : i32
    return %c0_i32, %c0_i32_0 : i32, i32
  }
  func.func @transform_3(%arg0: i32, %arg1: memref<2xi32, #tpu.memory_space<smem>>) -> (i32, i32) {
    %c0_i32 = arith.constant 0 : i32
    %c0_i32_0 = arith.constant 0 : i32
    %c0_i32_1 = arith.constant 0 : i32
    return %c0_i32, %c0_i32_0 : i32, i32
  }
  func.func @transform_4(%arg0: i32, %arg1: memref<2xi32, #tpu.memory_space<smem>>) -> (i32, i32) {
    %c0_i32 = arith.constant 0 : i32
    %c0_i32_0 = arith.constant 0 : i32
    %c0_i32_1 = arith.constant 0 : i32
    return %c0_i32, %c0_i32_0 : i32, i32
  }
  func.func @transform_5(%arg0: i32, %arg1: memref<2xi32, #tpu.memory_space<smem>>) -> (i32, i32) {
    %c0_i32 = arith.constant 0 : i32
    %c0_i32_0 = arith.constant 0 : i32
    %c0_i32_1 = arith.constant 0 : i32
    return %c0_i32, %c0_i32_0 : i32, i32
  }
  func.func @transform_6(%arg0: i32, %arg1: memref<2xi32, #tpu.memory_space<smem>>) -> (i32, i32) {
    %c0_i32 = arith.constant 0 : i32
    %c0_i32_0 = arith.constant 0 : i32
    %c0_i32_1 = arith.constant 0 : i32
    return %c0_i32, %c0_i32_0 : i32, i32
  }
  func.func @transform_7(%arg0: i32, %arg1: memref<2xi32, #tpu.memory_space<smem>>) -> (i32, i32) {
    %c0_i32 = arith.constant 0 : i32
    %c0_i32_0 = arith.constant 0 : i32
    %c0_i32_1 = arith.constant 0 : i32
    return %c0_i32, %c0_i32_0 : i32, i32
  }
  func.func @transform_8(%arg0: i32, %arg1: memref<2xi32, #tpu.memory_space<smem>>) -> (i32, i32) {
    %c0_i32 = arith.constant 0 : i32
    %c0_i32_0 = arith.constant 0 : i32
    %c0_i32_1 = arith.constant 0 : i32
    return %c0_i32, %c0_i32_0 : i32, i32
  }
  func.func @transform_9(%arg0: i32, %arg1: memref<2xi32, #tpu.memory_space<smem>>) -> (i32, i32) {
    %c0_i32 = arith.constant 0 : i32
    %c0_i32_0 = arith.constant 0 : i32
    %c0_i32_1 = arith.constant 0 : i32
    return %c0_i32, %c0_i32_0 : i32, i32
  }
  func.func @transform_10(%arg0: i32, %arg1: memref<2xi32, #tpu.memory_space<smem>>) -> (i32, i32) {
    %c0_i32 = arith.constant 0 : i32
    %c0_i32_0 = arith.constant 0 : i32
    return %arg0, %c0_i32 : i32, i32
  }
  func.func @transform_11(%arg0: i32, %arg1: memref<2xi32, #tpu.memory_space<smem>>) -> (i32, i32) {
    %c0_i32 = arith.constant 0 : i32
    %c0_i32_0 = arith.constant 0 : i32
    return %arg0, %c0_i32 : i32, i32
  }
}

</mosaic_0001>

<llo_original>
// kernel: tpu_custom_call.1
$region0: #{tpu_custom_call.1}
  #allocation0 [shape = 'u32[]', space=smem, size = 0x4, offset = 0x4, fixed_abs, tag = 'smem constant byte address 0x4 - core index']
  #allocation1 [shape = 'u32[144,128]{1,0:T(1,128)}', space=vmem, size = 0x12000, scoped, tag = 'internal scratch']
  #allocation2 [shape = 's32[1]{0}', space=sflag, size = 0x4, scoped, tag = 'scoped memory for tpu_custom_call.1']
  #allocation3 [shape = 'u8[512]{0}', space=smem, size = 0x200, scoped, tag = 'prefetched SMEM operand 0']
  %s0 = inlined_call_operand.hbm [shape: s32[2], index: 0, kind: input, shape index: {}]
  %s1 = inlined_call_operand.hbm [shape: bf16[16,32], index: 1, kind: input, shape index: {}]
  %s2 = inlined_call_operand.hbm [shape: bf16[16,128], index: 2, kind: input, shape index: {}]
  %s3 = inlined_call_operand.hbm [shape: bf16[32,1024], index: 3, kind: input, shape index: {}]
  %s4 = inlined_call_operand.vmem [shape: f32[1,1024], index: 4, kind: input, shape index: {}]
  %s5 = inlined_call_operand.hbm [shape: bf16[1024,512], index: 5, kind: input, shape index: {}]
  %s6 = inlined_call_operand.vmem [shape: f32[1,512], index: 6, kind: input, shape index: {}]
  %s7 = inlined_call_operand.hbm [shape: bf16[512,128], index: 7, kind: input, shape index: {}]
  %s8 = inlined_call_operand.vmem [shape: f32[1,128], index: 8, kind: input, shape index: {}]
  %s9 = inlined_call_operand.hbm [shape: bf16[128,128], index: 9, kind: input, shape index: {}]
  %s10 = inlined_call_operand.vmem [shape: f32[1,128], index: 10, kind: input, shape index: {}]
  %s11 = inlined_call_operand.hbm [shape: bf16[16,128], index: 11, kind: output, shape index: {0}]
  %s12 = inlined_call_operand.hbm [shape: f32[8,128], index: 12, kind: output, shape index: {1}]
  %13 = xla_tuple %s11, %s12
  %s14 = sld [smem:[#allocation0]]
  $region82: #{tpu_custom_call.1} parent=0
    _
  %s16 = ssub.s32 1, %s14
  %s17 = scalar_select 0, %s16, %s14
  %19 = dma.hbm_to_smem %s0, 16, [#allocation3], [#allocation2]
  %20 = dma.done [#allocation2], 16
  %21 = sfence
  $region1: #{tpu_custom_call.1} parent=0
    #allocation4 [shape = 'u8[4096]{0}', space=vmem, size = 0x1000, scoped, tag = 'input window, operand 1, single buffered']
    #allocation5 [shape = 's32[1]{0}', space=sflag, size = 0x4, scoped, tag = 'scoped memory for tpu_custom_call.1']
    #allocation6 [shape = 's32[1]{0}', space=sflag, size = 0x4, scoped, tag = 'scoped memory for tpu_custom_call.1']
    #allocation7 [shape = 'u8[4096]{0}', space=vmem, size = 0x1000, scoped, tag = 'input window, operand 2, single buffered']
    #allocation8 [shape = 's32[1]{0}', space=sflag, size = 0x4, scoped, tag = 'scoped memory for tpu_custom_call.1']
    #allocation9 [shape = 'u8[65536]{0}', space=vmem, size = 0x10000, scoped, tag = 'input window, operand 3, single buffered']
    #allocation10 [shape = 'u8[1048576]{0}', space=vmem, size = 0x100000, scoped, tag = 'input window, operand 5, single buffered']
    #allocation11 [shape = 's32[1]{0}', space=sflag, size = 0x4, scoped, tag = 'scoped memory for tpu_custom_call.1']
    #allocation12 [shape = 'u8[131072]{0}', space=vmem, size = 0x20000, scoped, tag = 'input window, operand 7, single buffered']
    #allocation13 [shape = 'u8[32768]{0}', space=vmem, size = 0x8000, scoped, tag = 'input window, operand 9, single buffered']
    #allocation14 [shape = 's32[1]{0}', space=sflag, size = 0x4, scoped, tag = 'scoped memory for tpu_custom_call.1']
    #allocation15 [shape = 'u8[4096]{0}', space=vmem, size = 0x1000, scoped, tag = 'output window, operand 0, single buffered']
    #allocation16 [shape = 'u8[4096]{0}', space=vmem, size = 0x1000, scoped, tag = 'output window, operand 1, single buffered']
    #allocation17 [shape = 's32[1]{0}', space=sflag, size = 0x4, scoped, tag = 'scoped memory for tpu_custom_call.1']
    %22 = vsyncpa [#allocation5], 0
    %23 = vsyncpa [#allocation8], 0
    %24 = vsyncpa [#allocation11], 0
    %25 = vsyncpa [#allocation14], 0
    %26 = vsyncpa [#allocation6], 0
    %27 = vsyncpa [#allocation17], 0
    // Predicated region
    $region2: #{tpu_custom_call.1} parent=1 // pred_check
      _
    $region3: #{tpu_custom_call.1} parent=1 // pred_check_branch
      %29 = sbr.rel (0) target = $region5
    $region4: #{tpu_custom_call.1} parent=1 // pred_region
      %s31 = ssub.s32 128, 128
      %32 = vsyncadd [#allocation5], %s31
      %s33 = sshll.u32 [#allocation4], 4
      %s34 = int_to_ptr.vmem [resolvable:$true] %s33
      %39 = dma.hbm_to_vmem [thread:$0]  %s1, 128, %s34, [#allocation5], 64, 64, 4
    $region5: #{tpu_custom_call.1} parent=1 // pred_fallthru
      _
    // Predicated region
    $region6: #{tpu_custom_call.1} parent=1 // pred_check
      _
    $region7: #{tpu_custom_call.1} parent=1 // pred_check_branch
      %41 = sbr.rel (0) target = $region9
    $region8: #{tpu_custom_call.1} parent=1 // pred_region
      %s43 = ssub.s32 128, 128
      %44 = vsyncadd [#allocation8], %s43
      %s45 = sshll.u32 [#allocation7], 4
      %s46 = int_to_ptr.vmem [resolvable:$true] %s45
      %51 = dma.hbm_to_vmem [thread:$0]  %s2, 128, %s46, [#allocation8], 64, 64, 4
    $region9: #{tpu_custom_call.1} parent=1 // pred_fallthru
      _
    // Predicated region
    $region10: #{tpu_custom_call.1} parent=1 // pred_check
      _
    $region11: #{tpu_custom_call.1} parent=1 // pred_check_branch
      %53 = sbr.rel (0) target = $region13
    $region12: #{tpu_custom_call.1} parent=1 // pred_region
      %s55 = ssub.s32 2048, 2048
      %56 = vsyncadd [#allocation8], %s55
      %s57 = sshll.u32 [#allocation9], 4
      %s58 = int_to_ptr.vmem [resolvable:$true] %s57
      %63 = dma.hbm_to_vmem [thread:$0]  %s3, 2048, %s58, [#allocation8], 512, 512, 32
    $region13: #{tpu_custom_call.1} parent=1 // pred_fallthru
      _
    // Predicated region
    $region14: #{tpu_custom_call.1} parent=1 // pred_check
      _
    $region15: #{tpu_custom_call.1} parent=1 // pred_check_branch
      %65 = sbr.rel (0) target = $region17
    $region16: #{tpu_custom_call.1} parent=1 // pred_region
      _
    $region17: #{tpu_custom_call.1} parent=1 // pred_fallthru
      _
    // Predicated region
    $region18: #{tpu_custom_call.1} parent=1 // pred_check
      _
    $region19: #{tpu_custom_call.1} parent=1 // pred_check_branch
      %67 = sbr.rel (0) target = $region21
    $region20: #{tpu_custom_call.1} parent=1 // pred_region
      %s69 = ssub.s32 32768, 32768
      %70 = vsyncadd [#allocation11], %s69
      %s71 = sshll.u32 [#allocation10], 4
      %s72 = int_to_ptr.vmem [resolvable:$true] %s71
      %77 = dma.hbm_to_vmem [thread:$0]  %s5, 32768, %s72, [#allocation11], 256, 256, 16
    $region21: #{tpu_custom_call.1} parent=1 // pred_fallthru
      _
    // Predicated region
    $region22: #{tpu_custom_call.1} parent=1 // pred_check
      _
    $region23: #{tpu_custom_call.1} parent=1 // pred_check_branch
      %79 = sbr.rel (0) target = $region25
    $region24: #{tpu_custom_call.1} parent=1 // pred_region
      _
    $region25: #{tpu_custom_call.1} parent=1 // pred_fallthru
      _
    // Predicated region
    $region26: #{tpu_custom_call.1} parent=1 // pred_check
      _
    $region27: #{tpu_custom_call.1} parent=1 // pred_check_branch
      %81 = sbr.rel (0) target = $region29
    $region28: #{tpu_custom_call.1} parent=1 // pred_region
      %s83 = ssub.s32 4096, 4096
      %84 = vsyncadd [#allocation11], %s83
      %s85 = sshll.u32 [#allocation12], 4
      %s86 = int_to_ptr.vmem [resolvable:$true] %s85
      %91 = dma.hbm_to_vmem [thread:$0]  %s7, 4096, %s86, [#allocation11], 64, 64, 4
    $region29: #{tpu_custom_call.1} parent=1 // pred_fallthru
      _
    // Predicated region
    $region30: #{tpu_custom_call.1} parent=1 // pred_check
      _
    $region31: #{tpu_custom_call.1} parent=1 // pred_check_branch
      %93 = sbr.rel (0) target = $region33
    $region32: #{tpu_custom_call.1} parent=1 // pred_region
      _
    $region33: #{tpu_custom_call.1} parent=1 // pred_fallthru
      _
    // Predicated region
    $region34: #{tpu_custom_call.1} parent=1 // pred_check
      _
    $region35: #{tpu_custom_call.1} parent=1 // pred_check_branch
      %95 = sbr.rel (0) target = $region37
    $region36: #{tpu_custom_call.1} parent=1 // pred_region
      %s97 = ssub.s32 1024, 1024
      %98 = vsyncadd [#allocation14], %s97
      %s99 = sshll.u32 [#allocation13], 4
      %s100 = int_to_ptr.vmem [resolvable:$true] %s99
      %105 = dma.hbm_to_vmem [thread:$0]  %s9, 1024, %s100, [#allocation14], 64, 64, 4
    $region37: #{tpu_custom_call.1} parent=1 // pred_fallthru
      _
    // Predicated region
    $region38: #{tpu_custom_call.1} parent=1 // pred_check
      _
    $region39: #{tpu_custom_call.1} parent=1 // pred_check_branch
      %107 = sbr.rel (0) target = $region41
    $region40: #{tpu_custom_call.1} parent=1 // pred_region
      _
    $region41: #{tpu_custom_call.1} parent=1 // pred_fallthru
      _
    // Predicated region
    $region42: #{tpu_custom_call.1} parent=1 // pred_check
      _
    $region43: #{tpu_custom_call.1} parent=1 // pred_check_branch
      %109 = sbr.rel (0) target = $region45
    $region44: #{tpu_custom_call.1} parent=1 // pred_region
      %110 = dma.done [#allocation5], 128
    $region45: #{tpu_custom_call.1} parent=1 // pred_fallthru
      _
    // Predicated region
    $region46: #{tpu_custom_call.1} parent=1 // pred_check
      _
    $region47: #{tpu_custom_call.1} parent=1 // pred_check_branch
      %112 = sbr.rel (0) target = $region49
    $region48: #{tpu_custom_call.1} parent=1 // pred_region
      %113 = dma.done [#allocation8], 128
    $region49: #{tpu_custom_call.1} parent=1 // pred_fallthru
      _
    // Predicated region
    $region50: #{tpu_custom_call.1} parent=1 // pred_check
      _
    $region51: #{tpu_custom_call.1} parent=1 // pred_check_branch
      %115 = sbr.rel (0) target = $region53
    $region52: #{tpu_custom_call.1} parent=1 // pred_region
      %116 = dma.done [#allocation8], 2048
    $region53: #{tpu_custom_call.1} parent=1 // pred_fallthru
      _
    // Predicated region
    $region54: #{tpu_custom_call.1} parent=1 // pred_check
      _
    $region55: #{tpu_custom_call.1} parent=1 // pred_check_branch
      %118 = sbr.rel (0) target = $region57
    $region56: #{tpu_custom_call.1} parent=1 // pred_region
      %119 = dma.done [#allocation11], 32768
    $region57: #{tpu_custom_call.1} parent=1 // pred_fallthru
      _
    // Predicated region
    $region58: #{tpu_custom_call.1} parent=1 // pred_check
      _
    $region59: #{tpu_custom_call.1} parent=1 // pred_check_branch
      %121 = sbr.rel (0) target = $region61
    $region60: #{tpu_custom_call.1} parent=1 // pred_region
      %122 = dma.done [#allocation11], 4096
    $region61: #{tpu_custom_call.1} parent=1 // pred_fallthru
      _
    // Predicated region
    $region62: #{tpu_custom_call.1} parent=1 // pred_check
      _
    $region63: #{tpu_custom_call.1} parent=1 // pred_check_branch
      %124 = sbr.rel (0) target = $region65
    $region64: #{tpu_custom_call.1} parent=1 // pred_region
      %125 = dma.done [#allocation14], 1024
    $region65: #{tpu_custom_call.1} parent=1 // pred_fallthru
      _
    %v129 = vld [vmem:[#allocation4] sm:$0xf]
    %v130 = vld [vmem:[#allocation4 + $0x4] sm:$0xf]
    %v131 = vld [vmem:[#allocation9] sm:$0xff]
    %v132 = vld [vmem:[#allocation9 + $0x8] sm:$0xff]
    %v133 = vld [vmem:[#allocation9 + $0x10] sm:$0xff]
    %v134 = vld [vmem:[#allocation9 + $0x18] sm:$0xff]
    %v135 = vld [vmem:[#allocation9 + $0x20] sm:$0xff]
    %v136 = vld [vmem:[#allocation9 + $0x28] sm:$0xff]
    %v137 = vld [vmem:[#allocation9 + $0x30] sm:$0xff]
    %v138 = vld [vmem:[#allocation9 + $0x38] sm:$0xff]
    %v139 = vld [vmem:[#allocation9 + $0x40] sm:$0xff]
    %v140 = vld [vmem:[#allocation9 + $0x48] sm:$0xff]
    %v141 = vld [vmem:[#allocation9 + $0x50] sm:$0xff]
    %v142 = vld [vmem:[#allocation9 + $0x58] sm:$0xff]
    %v143 = vld [vmem:[#allocation9 + $0x60] sm:$0xff]
    %v144 = vld [vmem:[#allocation9 + $0x68] sm:$0xff]
    %v145 = vld [vmem:[#allocation9 + $0x70] sm:$0xff]
    %v146 = vld [vmem:[#allocation9 + $0x78] sm:$0xff]
    %v147 = vld [vmem:[%s4] sm:$0xff]
    %v149 = vlaneseq
    %v150 = vshrl.u32 %v149, 7
    %v151 = vsub.s32 0, %v150
    %v152 = vrot.slane %v147, %v151
    %v153 = vlaneseq
    %v154 = vshrl.u32 %v153, 7
    %v155 = vsub.s32 1, %v154
    %v156 = vrot.slane %v147, %v155
    %v157 = vlaneseq
    %v158 = vshrl.u32 %v157, 7
    %v159 = vsub.s32 2, %v158
    %v160 = vrot.slane %v147, %v159
    %v161 = vlaneseq
    %v162 = vshrl.u32 %v161, 7
    %v163 = vsub.s32 3, %v162
    %v164 = vrot.slane %v147, %v163
    %v165 = vlaneseq
    %v166 = vshrl.u32 %v165, 7
    %v167 = vsub.s32 4, %v166
    %v168 = vrot.slane %v147, %v167
    %v169 = vlaneseq
    %v170 = vshrl.u32 %v169, 7
    %v171 = vsub.s32 5, %v170
    %v172 = vrot.slane %v147, %v171
    %v173 = vlaneseq
    %v174 = vshrl.u32 %v173, 7
    %v175 = vsub.s32 6, %v174
    %v176 = vrot.slane %v147, %v175
    %v177 = vlaneseq
    %v178 = vshrl.u32 %v177, 7
    %v179 = vsub.s32 7, %v178
    %v180 = vrot.slane %v147, %v179
    %v191 = vunpack.c.l.b16 %v129
    %v192 = vunpack.c.l.b16 %v130
    %v193 = vpack.c.b16 %v192, %v191
    %v210 = vunpack.c.l.b16 %v131
    %v211 = vunpack.c.h.b16 %v131
    %v212 = vunpack.c.l.b16 %v132
    %v213 = vunpack.c.h.b16 %v132
    %v214 = vunpack.c.l.b16 %v133
    %v215 = vunpack.c.h.b16 %v133
    %v216 = vunpack.c.l.b16 %v134
    %v217 = vunpack.c.h.b16 %v134
    %v218 = vunpack.c.l.b16 %v135
    %v219 = vunpack.c.h.b16 %v135
    %v220 = vunpack.c.l.b16 %v136
    %v221 = vunpack.c.h.b16 %v136
    %v222 = vunpack.c.l.b16 %v137
    %v223 = vunpack.c.h.b16 %v137
    %v224 = vunpack.c.l.b16 %v138
    %v225 = vunpack.c.h.b16 %v138
    %v226 = vunpack.c.l.b16 %v139
    %v227 = vunpack.c.h.b16 %v139
    %v228 = vunpack.c.l.b16 %v140
    %v229 = vunpack.c.h.b16 %v140
    %v230 = vunpack.c.l.b16 %v141
    %v231 = vunpack.c.h.b16 %v141
    %v232 = vunpack.c.l.b16 %v142
    %v233 = vunpack.c.h.b16 %v142
    %v234 = vunpack.c.l.b16 %v143
    %v235 = vunpack.c.h.b16 %v143
    %v236 = vunpack.c.l.b16 %v144
    %v237 = vunpack.c.h.b16 %v144
    %v238 = vunpack.c.l.b16 %v145
    %v239 = vunpack.c.h.b16 %v145
    %v240 = vunpack.c.l.b16 %v146
    %v241 = vunpack.c.h.b16 %v146
    %v242 = vpack.c.b16 %v218, %v210
    %v243 = vpack.c.b16 %v219, %v211
    %v244 = vpack.c.b16 %v220, %v212
    %v245 = vpack.c.b16 %v221, %v213
    %v246 = vpack.c.b16 %v222, %v214
    %v247 = vpack.c.b16 %v223, %v215
    %v248 = vpack.c.b16 %v224, %v216
    %v249 = vpack.c.b16 %v225, %v217
    %v250 = vpack.c.b16 %v234, %v226
    %v251 = vpack.c.b16 %v235, %v227
    %v252 = vpack.c.b16 %v236, %v228
    %v253 = vpack.c.b16 %v237, %v229
    %v254 = vpack.c.b16 %v238, %v230
    %v255 = vpack.c.b16 %v239, %v231
    %v256 = vpack.c.b16 %v240, %v232
    %v257 = vpack.c.b16 %v241, %v233
    %vm274 = vcmask 261120
    %v276 = vsel %vm274, %v193, 0
    %278 = vmatprep.subr.bf16.mxu0 %v243
    %279 = vmatpush1.bf16.msra.mxu0 %v242
    %280 = vmatprep.subr.bf16.mxu0 %v251
    %281 = vmatpush1.bf16.msra.mxu0 %v250
    %282 = vmatprep.subr.bf16.mxu0 0
    %283 = vmatpush1.bf16.msra.mxu0 0
    %284 = vmatprep.subr.bf16.mxu0 0
    %285 = vmatpush1.bf16.msra.mxu0 0
    %286 = vmatprep.subr.bf16.mxu0 0
    %287 = vmatpush1.bf16.msra.mxu0 0
    %288 = vmatprep.subr.bf16.mxu0 0
    %289 = vmatpush1.bf16.msra.mxu0 0
    %290 = vmatprep.subr.bf16.mxu0 0
    %291 = vmatpush1.bf16.msra.mxu0 0
    %292 = vmatprep.subr.bf16.mxu0 0
    %293 = vmatpush1.bf16.msra.mxu0 0
    %294 = vmatprep.subr.bf16.mxu0 0
    %295 = vmatpush1.bf16.msra.mxu0 0
    %296 = vmatprep.subr.bf16.mxu0 0
    %297 = vmatpush1.bf16.msra.mxu0 0
    %298 = vmatprep.subr.bf16.mxu0 0
    %299 = vmatpush1.bf16.msra.mxu0 0
    %300 = vmatprep.subr.bf16.mxu0 0
    %301 = vmatpush1.bf16.msra.mxu0 0
    %302 = vmatprep.subr.bf16.mxu0 0
    %303 = vmatpush1.bf16.msra.mxu0 0
    %304 = vmatprep.subr.bf16.mxu0 0
    %305 = vmatpush1.bf16.msra.mxu0 0
    %306 = vmatprep.subr.bf16.mxu0 0
    %307 = vmatpush1.bf16.msra.mxu0 0
    %308 = vmatprep.subr.bf16.mxu0 0
    %309 = vmatpush1.bf16.msra.mxu0 0
    %310 = vmatprep.mubr.bf16.mxu0 0
    %311 = vmatmul.mubr.bf16.gmra.mrb[0].mxu0 %v276
    %v312 = vpop.f32.mrb[0].mxu0
    %v313 = vadd.f32 %v152, %v312
    %v314 = vpop.f32.mrb[0].mxu0
    %v315 = vadd.f32 %v156, %v314
    %v316 = vpop.f32.mrb[0].mxu0
    %v317 = vadd.f32 %v152, %v316
    %v318 = vpop.f32.mrb[0].mxu0
    %v319 = vadd.f32 %v156, %v318
    %320 = vdwg.mxu0
    %321 = vmatprep.subr.bf16.mxu0 %v245
    %322 = vmatpush1.bf16.msra.mxu0 %v244
    %323 = vmatprep.subr.bf16.mxu0 %v253
    %324 = vmatpush1.bf16.msra.mxu0 %v252
    %325 = vmatprep.subr.bf16.mxu0 0
    %326 = vmatpush1.bf16.msra.mxu0 0
    %327 = vmatprep.subr.bf16.mxu0 0
    %328 = vmatpush1.bf16.msra.mxu0 0
    %329 = vmatprep.subr.bf16.mxu0 0
    %330 = vmatpush1.bf16.msra.mxu0 0
    %331 = vmatprep.subr.bf16.mxu0 0
    %332 = vmatpush1.bf16.msra.mxu0 0
    %333 = vmatprep.subr.bf16.mxu0 0
    %334 = vmatpush1.bf16.msra.mxu0 0
    %335 = vmatprep.subr.bf16.mxu0 0
    %336 = vmatpush1.bf16.msra.mxu0 0
    %337 = vmatprep.subr.bf16.mxu0 0
    %338 = vmatpush1.bf16.msra.mxu0 0
    %339 = vmatprep.subr.bf16.mxu0 0
    %340 = vmatpush1.bf16.msra.mxu0 0
    %341 = vmatprep.subr.bf16.mxu0 0
    %342 = vmatpush1.bf16.msra.mxu0 0
    %343 = vmatprep.subr.bf16.mxu0 0
    %344 = vmatpush1.bf16.msra.mxu0 0
    %345 = vmatprep.subr.bf16.mxu0 0
    %346 = vmatpush1.bf16.msra.mxu0 0
    %347 = vmatprep.subr.bf16.mxu0 0
    %348 = vmatpush1.bf16.msra.mxu0 0
    %349 = vmatprep.subr.bf16.mxu0 0
    %350 = vmatpush1.bf16.msra.mxu0 0
    %351 = vmatprep.subr.bf16.mxu0 0
    %352 = vmatpush1.bf16.msra.mxu0 0
    %353 = vmatprep.mubr.bf16.mxu0 0
    %354 = vmatmul.mubr.bf16.gmra.mrb[0].mxu0 %v276
    %v355 = vpop.f32.mrb[0].mxu0
    %v356 = vadd.f32 %v160, %v355
    %v357 = vpop.f32.mrb[0].mxu0
    %v358 = vadd.f32 %v164, %v357
    %v359 = vpop.f32.mrb[0].mxu0
    %v360 = vadd.f32 %v160, %v359
    %v361 = vpop.f32.mrb[0].mxu0
    %v362 = vadd.f32 %v164, %v361
    %363 = vdwg.mxu0
    %364 = vmatprep.subr.bf16.mxu0 %v247
    %365 = vmatpush1.bf16.msra.mxu0 %v246
    %366 = vmatprep.subr.bf16.mxu0 %v255
    %367 = vmatpush1.bf16.msra.mxu0 %v254
    %368 = vmatprep.subr.bf16.mxu0 0
    %369 = vmatpush1.bf16.msra.mxu0 0
    %370 = vmatprep.subr.bf16.mxu0 0
    %371 = vmatpush1.bf16.msra.mxu0 0
    %372 = vmatprep.subr.bf16.mxu0 0
    %373 = vmatpush1.bf16.msra.mxu0 0
    %374 = vmatprep.subr.bf16.mxu0 0
    %375 = vmatpush1.bf16.msra.mxu0 0
    %376 = vmatprep.subr.bf16.mxu0 0
    %377 = vmatpush1.bf16.msra.mxu0 0
    %378 = vmatprep.subr.bf16.mxu0 0
    %379 = vmatpush1.bf16.msra.mxu0 0
    %380 = vmatprep.subr.bf16.mxu0 0
    %381 = vmatpush1.bf16.msra.mxu0 0
    %382 = vmatprep.subr.bf16.mxu0 0
    %383 = vmatpush1.bf16.msra.mxu0 0
    %384 = vmatprep.subr.bf16.mxu0 0
    %385 = vmatpush1.bf16.msra.mxu0 0
    %386 = vmatprep.subr.bf16.mxu0 0
    %387 = vmatpush1.bf16.msra.mxu0 0
    %388 = vmatprep.subr.bf16.mxu0 0
    %389 = vmatpush1.bf16.msra.mxu0 0
    %390 = vmatprep.subr.bf16.mxu0 0
    %391 = vmatpush1.bf16.msra.mxu0 0
    %392 = vmatprep.subr.bf16.mxu0 0
    %393 = vmatpush1.bf16.msra.mxu0 0
    %394 = vmatprep.subr.bf16.mxu0 0
    %395 = vmatpush1.bf16.msra.mxu0 0
    %396 = vmatprep.mubr.bf16.mxu0 0
    %397 = vmatmul.mubr.bf16.gmra.mrb[0].mxu0 %v276
    %v398 = vpop.f32.mrb[0].mxu0
    %v399 = vadd.f32 %v168, %v398
    %v400 = vpop.f32.mrb[0].mxu0
    %v401 = vadd.f32 %v172, %v400
    %v402 = vpop.f32.mrb[0].mxu0
    %v403 = vadd.f32 %v168, %v402
    %v404 = vpop.f32.mrb[0].mxu0
    %v405 = vadd.f32 %v172, %v404
    %406 = vdwg.mxu0
    %407 = vmatprep.subr.bf16.mxu0 %v249
    %408 = vmatpush1.bf16.msra.mxu0 %v248
    %409 = vmatprep.subr.bf16.mxu0 %v257
    %410 = vmatpush1.bf16.msra.mxu0 %v256
    %411 = vmatprep.subr.bf16.mxu0 0
    %412 = vmatpush1.bf16.msra.mxu0 0
    %413 = vmatprep.subr.bf16.mxu0 0
    %414 = vmatpush1.bf16.msra.mxu0 0
    %415 = vmatprep.subr.bf16.mxu0 0
    %416 = vmatpush1.bf16.msra.mxu0 0
    %417 = vmatprep.subr.bf16.mxu0 0
    %418 = vmatpush1.bf16.msra.mxu0 0
    %419 = vmatprep.subr.bf16.mxu0 0
    %420 = vmatpush1.bf16.msra.mxu0 0
    %421 = vmatprep.subr.bf16.mxu0 0
    %422 = vmatpush1.bf16.msra.mxu0 0
    %423 = vmatprep.subr.bf16.mxu0 0
    %424 = vmatpush1.bf16.msra.mxu0 0
    %425 = vmatprep.subr.bf16.mxu0 0
    %426 = vmatpush1.bf16.msra.mxu0 0
    %427 = vmatprep.subr.bf16.mxu0 0
    %428 = vmatpush1.bf16.msra.mxu0 0
    %429 = vmatprep.subr.bf16.mxu0 0
    %430 = vmatpush1.bf16.msra.mxu0 0
    %431 = vmatprep.subr.bf16.mxu0 0
    %432 = vmatpush1.bf16.msra.mxu0 0
    %433 = vmatprep.subr.bf16.mxu0 0
    %434 = vmatpush1.bf16.msra.mxu0 0
    %435 = vmatprep.subr.bf16.mxu0 0
    %436 = vmatpush1.bf16.msra.mxu0 0
    %437 = vmatprep.subr.bf16.mxu0 0
    %438 = vmatpush1.bf16.msra.mxu0 0
    %439 = vmatprep.mubr.bf16.mxu0 0
    %440 = vmatmul.mubr.bf16.gmra.mrb[0].mxu0 %v276
    %v441 = vpop.f32.mrb[0].mxu0
    %v442 = vadd.f32 %v176, %v441
    %v443 = vpop.f32.mrb[0].mxu0
    %v444 = vadd.f32 %v180, %v443
    %v445 = vpop.f32.mrb[0].mxu0
    %v446 = vadd.f32 %v176, %v445
    %v447 = vpop.f32.mrb[0].mxu0
    %v448 = vadd.f32 %v180, %v447
    %449 = vdwg.mxu0
    %v450 = vpack.c.bf16 %v317, %v313
    %v451 = vpack.c.bf16 %v319, %v315
    %v452 = vpack.c.bf16 %v360, %v356
    %v453 = vpack.c.bf16 %v362, %v358
    %v454 = vpack.c.bf16 %v403, %v399
    %v455 = vpack.c.bf16 %v405, %v401
    %v456 = vpack.c.bf16 %v446, %v442
    %v457 = vpack.c.bf16 %v448, %v444
    %v458 = vmin.bf16 %v450, 1101021600
    %v459 = vmin.bf16 %v451, 1101021600
    %v460 = vmin.bf16 %v452, 1101021600
    %v461 = vmin.bf16 %v453, 1101021600
    %v462 = vmin.bf16 %v454, 1101021600
    %v463 = vmin.bf16 %v455, 1101021600
    %v464 = vmin.bf16 %v456, 1101021600
    %v465 = vmin.bf16 %v457, 1101021600
    %v467 = vmul.bf16 %v458, 1069105081
    %v468 = vpow.bf16.pop %v467
    %v470 = vmul.bf16 %v459, 1069105081
    %v471 = vpow.bf16.pop %v470
    %v473 = vmul.bf16 %v460, 1069105081
    %v474 = vpow.bf16.pop %v473
    %v476 = vmul.bf16 %v461, 1069105081
    %v477 = vpow.bf16.pop %v476
    %v479 = vmul.bf16 %v462, 1069105081
    %v480 = vpow.bf16.pop %v479
    %v482 = vmul.bf16 %v463, 1069105081
    %v483 = vpow.bf16.pop %v482
    %v485 = vmul.bf16 %v464, 1069105081
    %v486 = vpow.bf16.pop %v485
    %v488 = vmul.bf16 %v465, 1069105081
    %v489 = vpow.bf16.pop %v488
    %v490 = vadd.bf16 %v468, 1073758208
    %v491 = vadd.bf16 %v471, 1073758208
    %v492 = vadd.bf16 %v474, 1073758208
    %v493 = vadd.bf16 %v477, 1073758208
    %v494 = vadd.bf16 %v480, 1073758208
    %v495 = vadd.bf16 %v483, 1073758208
    %v496 = vadd.bf16 %v486, 1073758208
    %v497 = vadd.bf16 %v489, 1073758208
    %v498 = vmul.bf16 %v468, %v490
    %v499 = vmul.bf16 %v471, %v491
    %v500 = vmul.bf16 %v474, %v492
    %v501 = vmul.bf16 %v477, %v493
    %v502 = vmul.bf16 %v480, %v494
    %v503 = vmul.bf16 %v483, %v495
    %v504 = vmul.bf16 %v486, %v496
    %v505 = vmul.bf16 %v489, %v497
    %v506 = vadd.bf16 %v498, 1073758208
    %v507 = vadd.bf16 %v499, 1073758208
    %v508 = vadd.bf16 %v500, 1073758208
    %v509 = vadd.bf16 %v501, 1073758208
    %v510 = vadd.bf16 %v502, 1073758208
    %v511 = vadd.bf16 %v503, 1073758208
    %v512 = vadd.bf16 %v504, 1073758208
    %v513 = vadd.bf16 %v505, 1073758208
    %v514 = vrcp.bf16.pop %v506
    %v515 = vmul.bf16 %v498, %v514
    %v516 = vrcp.bf16.pop %v507
    %v517 = vmul.bf16 %v499, %v516
    %v518 = vrcp.bf16.pop %v508
    %v519 = vmul.bf16 %v500, %v518
    %v520 = vrcp.bf16.pop %v509
    %v521 = vmul.bf16 %v501, %v520
    %v522 = vrcp.bf16.pop %v510
    %v523 = vmul.bf16 %v502, %v522
    %v524 = vrcp.bf16.pop %v511
    %v525 = vmul.bf16 %v503, %v524
    %v526 = vrcp.bf16.pop %v512
    %v527 = vmul.bf16 %v504, %v526
    %v528 = vrcp.bf16.pop %v513
    %v529 = vmul.bf16 %v505, %v528
    %v530 = vmul.bf16 %v450, %v515
    %v531 = vmul.bf16 %v451, %v517
    %v532 = vmul.bf16 %v452, %v519
    %v533 = vmul.bf16 %v453, %v521
    %v534 = vmul.bf16 %v454, %v523
    %v535 = vmul.bf16 %v455, %v525
    %v536 = vmul.bf16 %v456, %v527
    %v537 = vmul.bf16 %v457, %v529
    %v538 = vld [vmem:[#allocation10] sm:$0xff]
    %v539 = vld [vmem:[#allocation10 + $0x8] sm:$0xff]
    %v540 = vld [vmem:[#allocation10 + $0x10] sm:$0xff]
    %v541 = vld [vmem:[#allocation10 + $0x18] sm:$0xff]
    %v542 = vld [vmem:[#allocation10 + $0x20] sm:$0xff]
    %v543 = vld [vmem:[#allocation10 + $0x28] sm:$0xff]
    %v544 = vld [vmem:[#allocation10 + $0x30] sm:$0xff]
    %v545 = vld [vmem:[#allocation10 + $0x38] sm:$0xff]
    %v546 = vld [vmem:[#allocation10 + $0x40] sm:$0xff]
    %v547 = vld [vmem:[#allocation10 + $0x48] sm:$0xff]
    %v548 = vld [vmem:[#allocation10 + $0x50] sm:$0xff]
    %v549 = vld [vmem:[#allocation10 + $0x58] sm:$0xff]
    %v550 = vld [vmem:[#allocation10 + $0x60] sm:$0xff]
    %v551 = vld [vmem:[#allocation10 + $0x68] sm:$0xff]
    %v552 = vld [vmem:[#allocation10 + $0x70] sm:$0xff]
    %v553 = vld [vmem:[#allocation10 + $0x78] sm:$0xff]
    %v554 = vld [vmem:[#allocation10 + $0x80] sm:$0xff]
    %v555 = vld [vmem:[#allocation10 + $0x88] sm:$0xff]
    %v556 = vld [vmem:[#allocation10 + $0x90] sm:$0xff]
    %v557 = vld [vmem:[#allocation10 + $0x98] sm:$0xff]
    %v558 = vld [vmem:[#allocation10 + $0xa0] sm:$0xff]
    %v559 = vld [vmem:[#allocation10 + $0xa8] sm:$0xff]
    %v560 = vld [vmem:[#allocation10 + $0xb0] sm:$0xff]
    %v561 = vld [vmem:[#allocation10 + $0xb8] sm:$0xff]
    %v562 = vld [vmem:[#allocation10 + $0xc0] sm:$0xff]
    %v563 = vld [vmem:[#allocation10 + $0xc8] sm:$0xff]
    %v564 = vld [vmem:[#allocation10 + $0xd0] sm:$0xff]
    %v565 = vld [vmem:[#allocation10 + $0xd8] sm:$0xff]
    %v566 = vld [vmem:[#allocation10 + $0xe0] sm:$0xff]
    %v567 = vld [vmem:[#allocation10 + $0xe8] sm:$0xff]
    %v568 = vld [vmem:[#allocation10 + $0xf0] sm:$0xff]
    %v569 = vld [vmem:[#allocation10 + $0xf8] sm:$0xff]
    %v570 = vld [vmem:[#allocation10 + $0x100] sm:$0xff]
    %v571 = vld [vmem:[#allocation10 + $0x108] sm:$0xff]
    %v572 = vld [vmem:[#allocation10 + $0x110] sm:$0xff]
    %v573 = vld [vmem:[#allocation10 + $0x118] sm:$0xff]
    %v574 = vld [vmem:[#allocation10 + $0x120] sm:$0xff]
    %v575 = vld [vmem:[#allocation10 + $0x128] sm:$0xff]
    %v576 = vld [vmem:[#allocation10 + $0x130] sm:$0xff]
    %v577 = vld [vmem:[#allocation10 + $0x138] sm:$0xff]
    %v578 = vld [vmem:[#allocation10 + $0x140] sm:$0xff]
    %v579 = vld [vmem:[#allocation10 + $0x148] sm:$0xff]
    %v580 = vld [vmem:[#allocation10 + $0x150] sm:$0xff]
    %v581 = vld [vmem:[#allocation10 + $0x158] sm:$0xff]
    %v582 = vld [vmem:[#allocation10 + $0x160] sm:$0xff]
    %v583 = vld [vmem:[#allocation10 + $0x168] sm:$0xff]
    %v584 = vld [vmem:[#allocation10 + $0x170] sm:$0xff]
    %v585 = vld [vmem:[#allocation10 + $0x178] sm:$0xff]
    %v586 = vld [vmem:[#allocation10 + $0x180] sm:$0xff]
    %v587 = vld [vmem:[#allocation10 + $0x188] sm:$0xff]
    %v588 = vld [vmem:[#allocation10 + $0x190] sm:$0xff]
    %v589 = vld [vmem:[#allocation10 + $0x198] sm:$0xff]
    %v590 = vld [vmem:[#allocation10 + $0x1a0] sm:$0xff]
    %v591 = vld [vmem:[#allocation10 + $0x1a8] sm:$0xff]
    %v592 = vld [vmem:[#allocation10 + $0x1b0] sm:$0xff]
    %v593 = vld [vmem:[#allocation10 + $0x1b8] sm:$0xff]
    %v594 = vld [vmem:[#allocation10 + $0x1c0] sm:$0xff]
    %v595 = vld [vmem:[#allocation10 + $0x1c8] sm:$0xff]
    %v596 = vld [vmem:[#allocation10 + $0x1d0] sm:$0xff]
    %v597 = vld [vmem:[#allocation10 + $0x1d8] sm:$0xff]
    %v598 = vld [vmem:[#allocation10 + $0x1e0] sm:$0xff]
    %v599 = vld [vmem:[#allocation10 + $0x1e8] sm:$0xff]
    %v600 = vld [vmem:[#allocation10 + $0x1f0] sm:$0xff]
    %v601 = vld [vmem:[#allocation10 + $0x1f8] sm:$0xff]
    %v602 = vld [vmem:[#allocation10 + $0x200] sm:$0xff]
    %v603 = vld [vmem:[#allocation10 + $0x208] sm:$0xff]
    %v604 = vld [vmem:[#allocation10 + $0x210] sm:$0xff]
    %v605 = vld [vmem:[#allocation10 + $0x218] sm:$0xff]
    %v606 = vld [vmem:[#allocation10 + $0x220] sm:$0xff]
    %v607 = vld [vmem:[#allocation10 + $0x228] sm:$0xff]
    %v608 = vld [vmem:[#allocation10 + $0x230] sm:$0xff]
    %v609 = vld [vmem:[#allocation10 + $0x238] sm:$0xff]
    %v610 = vld [vmem:[#allocation10 + $0x240] sm:$0xff]
    %v611 = vld [vmem:[#allocation10 + $0x248] sm:$0xff]
    %v612 = vld [vmem:[#allocation10 + $0x250] sm:$0xff]
    %v613 = vld [vmem:[#allocation10 + $0x258] sm:$0xff]
    %v614 = vld [vmem:[#allocation10 + $0x260] sm:$0xff]
    %v615 = vld [vmem:[#allocation10 + $0x268] sm:$0xff]
    %v616 = vld [vmem:[#allocation10 + $0x270] sm:$0xff]
    %v617 = vld [vmem:[#allocation10 + $0x278] sm:$0xff]
    %v618 = vld [vmem:[#allocation10 + $0x280] sm:$0xff]
    %v619 = vld [vmem:[#allocation10 + $0x288] sm:$0xff]
    %v620 = vld [vmem:[#allocation10 + $0x290] sm:$0xff]
    %v621 = vld [vmem:[#allocation10 + $0x298] sm:$0xff]
    %v622 = vld [vmem:[#allocation10 + $0x2a0] sm:$0xff]
    %v623 = vld [vmem:[#allocation10 + $0x2a8] sm:$0xff]
    %v624 = vld [vmem:[#allocation10 + $0x2b0] sm:$0xff]
    %v625 = vld [vmem:[#allocation10 + $0x2b8] sm:$0xff]
    %v626 = vld [vmem:[#allocation10 + $0x2c0] sm:$0xff]
    %v627 = vld [vmem:[#allocation10 + $0x2c8] sm:$0xff]
    %v628 = vld [vmem:[#allocation10 + $0x2d0] sm:$0xff]
    %v629 = vld [vmem:[#allocation10 + $0x2d8] sm:$0xff]
    %v630 = vld [vmem:[#allocation10 + $0x2e0] sm:$0xff]
    %v631 = vld [vmem:[#allocation10 + $0x2e8] sm:$0xff]
    %v632 = vld [vmem:[#allocation10 + $0x2f0] sm:$0xff]
    %v633 = vld [vmem:[#allocation10 + $0x2f8] sm:$0xff]
    %v634 = vld [vmem:[#allocation10 + $0x300] sm:$0xff]
    %v635 = vld [vmem:[#allocation10 + $0x308] sm:$0xff]
    %v636 = vld [vmem:[#allocation10 + $0x310] sm:$0xff]
    %v637 = vld [vmem:[#allocation10 + $0x318] sm:$0xff]
    %v638 = vld [vmem:[#allocation10 + $0x320] sm:$0xff]
    %v639 = vld [vmem:[#allocation10 + $0x328] sm:$0xff]
    %v640 = vld [vmem:[#allocation10 + $0x330] sm:$0xff]
    %v641 = vld [vmem:[#allocation10 + $0x338] sm:$0xff]
    %v642 = vld [vmem:[#allocation10 + $0x340] sm:$0xff]
    %v643 = vld [vmem:[#allocation10 + $0x348] sm:$0xff]
    %v644 = vld [vmem:[#allocation10 + $0x350] sm:$0xff]
    %v645 = vld [vmem:[#allocation10 + $0x358] sm:$0xff]
    %v646 = vld [vmem:[#allocation10 + $0x360] sm:$0xff]
    %v647 = vld [vmem:[#allocation10 + $0x368] sm:$0xff]
    %v648 = vld [vmem:[#allocation10 + $0x370] sm:$0xff]
    %v649 = vld [vmem:[#allocation10 + $0x378] sm:$0xff]
    %v650 = vld [vmem:[#allocation10 + $0x380] sm:$0xff]
    %v651 = vld [vmem:[#allocation10 + $0x388] sm:$0xff]
    %v652 = vld [vmem:[#allocation10 + $0x390] sm:$0xff]
    %v653 = vld [vmem:[#allocation10 + $0x398] sm:$0xff]
    %v654 = vld [vmem:[#allocation10 + $0x3a0] sm:$0xff]
    %v655 = vld [vmem:[#allocation10 + $0x3a8] sm:$0xff]
    %v656 = vld [vmem:[#allocation10 + $0x3b0] sm:$0xff]
    %v657 = vld [vmem:[#allocation10 + $0x3b8] sm:$0xff]
    %v658 = vld [vmem:[#allocation10 + $0x3c0] sm:$0xff]
    %v659 = vld [vmem:[#allocation10 + $0x3c8] sm:$0xff]
    %v660 = vld [vmem:[#allocation10 + $0x3d0] sm:$0xff]
    %v661 = vld [vmem:[#allocation10 + $0x3d8] sm:$0xff]
    %v662 = vld [vmem:[#allocation10 + $0x3e0] sm:$0xff]
    %v663 = vld [vmem:[#allocation10 + $0x3e8] sm:$0xff]
    %v664 = vld [vmem:[#allocation10 + $0x3f0] sm:$0xff]
    %v665 = vld [vmem:[#allocation10 + $0x3f8] sm:$0xff]
    %v666 = vld [vmem:[#allocation10 + $0x400] sm:$0xff]
    %v667 = vld [vmem:[#allocation10 + $0x408] sm:$0xff]
    %v668 = vld [vmem:[#allocation10 + $0x410] sm:$0xff]
    %v669 = vld [vmem:[#allocation10 + $0x418] sm:$0xff]
    %v670 = vld [vmem:[#allocation10 + $0x420] sm:$0xff]
    %v671 = vld [vmem:[#allocation10 + $0x428] sm:$0xff]
    %v672 = vld [vmem:[#allocation10 + $0x430] sm:$0xff]
    %v673 = vld [vmem:[#allocation10 + $0x438] sm:$0xff]
    %v674 = vld [vmem:[#allocation10 + $0x440] sm:$0xff]
    %v675 = vld [vmem:[#allocation10 + $0x448] sm:$0xff]
    %v676 = vld [vmem:[#allocation10 + $0x450] sm:$0xff]
    %v677 = vld [vmem:[#allocation10 + $0x458] sm:$0xff]
    %v678 = vld [vmem:[#allocation10 + $0x460] sm:$0xff]
    %v679 = vld [vmem:[#allocation10 + $0x468] sm:$0xff]
    %v680 = vld [vmem:[#allocation10 + $0x470] sm:$0xff]
    %v681 = vld [vmem:[#allocation10 + $0x478] sm:$0xff]
    %v682 = vld [vmem:[#allocation10 + $0x480] sm:$0xff]
    %v683 = vld [vmem:[#allocation10 + $0x488] sm:$0xff]
    %v684 = vld [vmem:[#allocation10 + $0x490] sm:$0xff]
    %v685 = vld [vmem:[#allocation10 + $0x498] sm:$0xff]
    %v686 = vld [vmem:[#allocation10 + $0x4a0] sm:$0xff]
    %v687 = vld [vmem:[#allocation10 + $0x4a8] sm:$0xff]
    %v688 = vld [vmem:[#allocation10 + $0x4b0] sm:$0xff]
    %v689 = vld [vmem:[#allocation10 + $0x4b8] sm:$0xff]
    %v690 = vld [vmem:[#allocation10 + $0x4c0] sm:$0xff]
    %v691 = vld [vmem:[#allocation10 + $0x4c8] sm:$0xff]
    %v692 = vld [vmem:[#allocation10 + $0x4d0] sm:$0xff]
    %v693 = vld [vmem:[#allocation10 + $0x4d8] sm:$0xff]
    %v694 = vld [vmem:[#allocation10 + $0x4e0] sm:$0xff]
    %v695 = vld [vmem:[#allocation10 + $0x4e8] sm:$0xff]
    %v696 = vld [vmem:[#allocation10 + $0x4f0] sm:$0xff]
    %v697 = vld [vmem:[#allocation10 + $0x4f8] sm:$0xff]
    %v698 = vld [vmem:[#allocation10 + $0x500] sm:$0xff]
    %v699 = vld [vmem:[#allocation10 + $0x508] sm:$0xff]
    %v700 = vld [vmem:[#allocation10 + $0x510] sm:$0xff]
    %v701 = vld [vmem:[#allocation10 + $0x518] sm:$0xff]
    %v702 = vld [vmem:[#allocation10 + $0x520] sm:$0xff]
    %v703 = vld [vmem:[#allocation10 + $0x528] sm:$0xff]
    %v704 = vld [vmem:[#allocation10 + $0x530] sm:$0xff]
    %v705 = vld [vmem:[#allocation10 + $0x538] sm:$0xff]
    %v706 = vld [vmem:[#allocation10 + $0x540] sm:$0xff]
    %v707 = vld [vmem:[#allocation10 + $0x548] sm:$0xff]
    %v708 = vld [vmem:[#allocation10 + $0x550] sm:$0xff]
    %v709 = vld [vmem:[#allocation10 + $0x558] sm:$0xff]
    %v710 = vld [vmem:[#allocation10 + $0x560] sm:$0xff]
    %v711 = vld [vmem:[#allocation10 + $0x568] sm:$0xff]
    %v712 = vld [vmem:[#allocation10 + $0x570] sm:$0xff]
    %v713 = vld [vmem:[#allocation10 + $0x578] sm:$0xff]
    %v714 = vld [vmem:[#allocation10 + $0x580] sm:$0xff]
    %v715 = vld [vmem:[#allocation10 + $0x588] sm:$0xff]
    %v716 = vld [vmem:[#allocation10 + $0x590] sm:$0xff]
    %v717 = vld [vmem:[#allocation10 + $0x598] sm:$0xff]
    %v718 = vld [vmem:[#allocation10 + $0x5a0] sm:$0xff]
    %v719 = vld [vmem:[#allocation10 + $0x5a8] sm:$0xff]
    %v720 = vld [vmem:[#allocation10 + $0x5b0] sm:$0xff]
    %v721 = vld [vmem:[#allocation10 + $0x5b8] sm:$0xff]
    %v722 = vld [vmem:[#allocation10 + $0x5c0] sm:$0xff]
    %v723 = vld [vmem:[#allocation10 + $0x5c8] sm:$0xff]
    %v724 = vld [vmem:[#allocation10 + $0x5d0] sm:$0xff]
    %v725 = vld [vmem:[#allocation10 + $0x5d8] sm:$0xff]
    %v726 = vld [vmem:[#allocation10 + $0x5e0] sm:$0xff]
    %v727 = vld [vmem:[#allocation10 + $0x5e8] sm:$0xff]
    %v728 = vld [vmem:[#allocation10 + $0x5f0] sm:$0xff]
    %v729 = vld [vmem:[#allocation10 + $0x5f8] sm:$0xff]
    %v730 = vld [vmem:[#allocation10 + $0x600] sm:$0xff]
    %v731 = vld [vmem:[#allocation10 + $0x608] sm:$0xff]
    %v732 = vld [vmem:[#allocation10 + $0x610] sm:$0xff]
    %v733 = vld [vmem:[#allocation10 + $0x618] sm:$0xff]
    %v734 = vld [vmem:[#allocation10 + $0x620] sm:$0xff]
    %v735 = vld [vmem:[#allocation10 + $0x628] sm:$0xff]
    %v736 = vld [vmem:[#allocation10 + $0x630] sm:$0xff]
    %v737 = vld [vmem:[#allocation10 + $0x638] sm:$0xff]
    %v738 = vld [vmem:[#allocation10 + $0x640] sm:$0xff]
    %v739 = vld [vmem:[#allocation10 + $0x648] sm:$0xff]
    %v740 = vld [vmem:[#allocation10 + $0x650] sm:$0xff]
    %v741 = vld [vmem:[#allocation10 + $0x658] sm:$0xff]
    %v742 = vld [vmem:[#allocation10 + $0x660] sm:$0xff]
    %v743 = vld [vmem:[#allocation10 + $0x668] sm:$0xff]
    %v744 = vld [vmem:[#allocation10 + $0x670] sm:$0xff]
    %v745 = vld [vmem:[#allocation10 + $0x678] sm:$0xff]
    %v746 = vld [vmem:[#allocation10 + $0x680] sm:$0xff]
    %v747 = vld [vmem:[#allocation10 + $0x688] sm:$0xff]
    %v748 = vld [vmem:[#allocation10 + $0x690] sm:$0xff]
    %v749 = vld [vmem:[#allocation10 + $0x698] sm:$0xff]
    %v750 = vld [vmem:[#allocation10 + $0x6a0] sm:$0xff]
    %v751 = vld [vmem:[#allocation10 + $0x6a8] sm:$0xff]
    %v752 = vld [vmem:[#allocation10 + $0x6b0] sm:$0xff]
    %v753 = vld [vmem:[#allocation10 + $0x6b8] sm:$0xff]
    %v754 = vld [vmem:[#allocation10 + $0x6c0] sm:$0xff]
    %v755 = vld [vmem:[#allocation10 + $0x6c8] sm:$0xff]
    %v756 = vld [vmem:[#allocation10 + $0x6d0] sm:$0xff]
    %v757 = vld [vmem:[#allocation10 + $0x6d8] sm:$0xff]
    %v758 = vld [vmem:[#allocation10 + $0x6e0] sm:$0xff]
    %v759 = vld [vmem:[#allocation10 + $0x6e8] sm:$0xff]
    %v760 = vld [vmem:[#allocation10 + $0x6f0] sm:$0xff]
    %v761 = vld [vmem:[#allocation10 + $0x6f8] sm:$0xff]
    %v762 = vld [vmem:[#allocation10 + $0x700] sm:$0xff]
    %v763 = vld [vmem:[#allocation10 + $0x708] sm:$0xff]
    %v764 = vld [vmem:[#allocation10 + $0x710] sm:$0xff]
    %v765 = vld [vmem:[#allocation10 + $0x718] sm:$0xff]
    %v766 = vld [vmem:[#allocation10 + $0x720] sm:$0xff]
    %v767 = vld [vmem:[#allocation10 + $0x728] sm:$0xff]
    %v768 = vld [vmem:[#allocation10 + $0x730] sm:$0xff]
    %v769 = vld [vmem:[#allocation10 + $0x738] sm:$0xff]
    %v770 = vld [vmem:[#allocation10 + $0x740] sm:$0xff]
    %v771 = vld [vmem:[#allocation10 + $0x748] sm:$0xff]
    %v772 = vld [vmem:[#allocation10 + $0x750] sm:$0xff]
    %v773 = vld [vmem:[#allocation10 + $0x758] sm:$0xff]
    %v774 = vld [vmem:[#allocation10 + $0x760] sm:$0xff]
    %v775 = vld [vmem:[#allocation10 + $0x768] sm:$0xff]
    %v776 = vld [vmem:[#allocation10 + $0x770] sm:$0xff]
    %v777 = vld [vmem:[#allocation10 + $0x778] sm:$0xff]
    %v778 = vld [vmem:[#allocation10 + $0x780] sm:$0xff]
    %v779 = vld [vmem:[#allocation10 + $0x788] sm:$0xff]
    %v780 = vld [vmem:[#allocation10 + $0x790] sm:$0xff]
    %v781 = vld [vmem:[#allocation10 + $0x798] sm:$0xff]
    %v782 = vld [vmem:[#allocation10 + $0x7a0] sm:$0xff]
    %v783 = vld [vmem:[#allocation10 + $0x7a8] sm:$0xff]
    %v784 = vld [vmem:[#allocation10 + $0x7b0] sm:$0xff]
    %v785 = vld [vmem:[#allocation10 + $0x7b8] sm:$0xff]
    %v786 = vld [vmem:[#allocation10 + $0x7c0] sm:$0xff]
    %v787 = vld [vmem:[#allocation10 + $0x7c8] sm:$0xff]
    %v788 = vld [vmem:[#allocation10 + $0x7d0] sm:$0xff]
    %v789 = vld [vmem:[#allocation10 + $0x7d8] sm:$0xff]
    %v790 = vld [vmem:[#allocation10 + $0x7e0] sm:$0xff]
    %v791 = vld [vmem:[#allocation10 + $0x7e8] sm:$0xff]
    %v792 = vld [vmem:[#allocation10 + $0x7f0] sm:$0xff]
    %v793 = vld [vmem:[#allocation10 + $0x7f8] sm:$0xff]
    %v794 = vld [vmem:[%s6] sm:$0xf]
    %v796 = vlaneseq
    %v797 = vshrl.u32 %v796, 7
    %v798 = vsub.s32 0, %v797
    %v799 = vrot.slane %v794, %v798
    %v800 = vlaneseq
    %v801 = vshrl.u32 %v800, 7
    %v802 = vsub.s32 1, %v801
    %v803 = vrot.slane %v794, %v802
    %v804 = vlaneseq
    %v805 = vshrl.u32 %v804, 7
    %v806 = vsub.s32 2, %v805
    %v807 = vrot.slane %v794, %v806
    %v808 = vlaneseq
    %v809 = vshrl.u32 %v808, 7
    %v810 = vsub.s32 3, %v809
    %v811 = vrot.slane %v794, %v810
    %v1072 = vunpack.c.l.b16 %v538
    %v1073 = vunpack.c.h.b16 %v538
    %v1074 = vunpack.c.l.b16 %v539
    %v1075 = vunpack.c.h.b16 %v539
    %v1076 = vunpack.c.l.b16 %v540
    %v1077 = vunpack.c.h.b16 %v540
    %v1078 = vunpack.c.l.b16 %v541
    %v1079 = vunpack.c.h.b16 %v541
    %v1080 = vunpack.c.l.b16 %v542
    %v1081 = vunpack.c.h.b16 %v542
    %v1082 = vunpack.c.l.b16 %v543
    %v1083 = vunpack.c.h.b16 %v543
    %v1084 = vunpack.c.l.b16 %v544
    %v1085 = vunpack.c.h.b16 %v544
    %v1086 = vunpack.c.l.b16 %v545
    %v1087 = vunpack.c.h.b16 %v545
    %v1088 = vunpack.c.l.b16 %v546
    %v1089 = vunpack.c.h.b16 %v546
    %v1090 = vunpack.c.l.b16 %v547
    %v1091 = vunpack.c.h.b16 %v547
    %v1092 = vunpack.c.l.b16 %v548
    %v1093 = vunpack.c.h.b16 %v548
    %v1094 = vunpack.c.l.b16 %v549
    %v1095 = vunpack.c.h.b16 %v549
    %v1096 = vunpack.c.l.b16 %v550
    %v1097 = vunpack.c.h.b16 %v550
    %v1098 = vunpack.c.l.b16 %v551
    %v1099 = vunpack.c.h.b16 %v551
    %v1100 = vunpack.c.l.b16 %v552
    %v1101 = vunpack.c.h.b16 %v552
    %v1102 = vunpack.c.l.b16 %v553
    %v1103 = vunpack.c.h.b16 %v553
    %v1104 = vunpack.c.l.b16 %v554
    %v1105 = vunpack.c.h.b16 %v554
    %v1106 = vunpack.c.l.b16 %v555
    %v1107 = vunpack.c.h.b16 %v555
    %v1108 = vunpack.c.l.b16 %v556
    %v1109 = vunpack.c.h.b16 %v556
    %v1110 = vunpack.c.l.b16 %v557
    %v1111 = vunpack.c.h.b16 %v557
    %v1112 = vunpack.c.l.b16 %v558
    %v1113 = vunpack.c.h.b16 %v558
    %v1114 = vunpack.c.l.b16 %v559
    %v1115 = vunpack.c.h.b16 %v559
    %v1116 = vunpack.c.l.b16 %v560
    %v1117 = vunpack.c.h.b16 %v560
    %v1118 = vunpack.c.l.b16 %v561
    %v1119 = vunpack.c.h.b16 %v561
    %v1120 = vunpack.c.l.b16 %v562
    %v1121 = vunpack.c.h.b16 %v562
    %v1122 = vunpack.c.l.b16 %v563
    %v1123 = vunpack.c.h.b16 %v563
    %v1124 = vunpack.c.l.b16 %v564
    %v1125 = vunpack.c.h.b16 %v564
    %v1126 = vunpack.c.l.b16 %v565
    %v1127 = vunpack.c.h.b16 %v565
    %v1128 = vunpack.c.l.b16 %v566
    %v1129 = vunpack.c.h.b16 %v566
    %v1130 = vunpack.c.l.b16 %v567
    %v1131 = vunpack.c.h.b16 %v567
    %v1132 = vunpack.c.l.b16 %v568
    %v1133 = vunpack.c.h.b16 %v568
    %v1134 = vunpack.c.l.b16 %v569
    %v1135 = vunpack.c.h.b16 %v569
    %v1136 = vunpack.c.l.b16 %v570
    %v1137 = vunpack.c.h.b16 %v570
    %v1138 = vunpack.c.l.b16 %v571
    %v1139 = vunpack.c.h.b16 %v571
    %v1140 = vunpack.c.l.b16 %v572
    %v1141 = vunpack.c.h.b16 %v572
    %v1142 = vunpack.c.l.b16 %v573
    %v1143 = vunpack.c.h.b16 %v573
    %v1144 = vunpack.c.l.b16 %v574
    %v1145 = vunpack.c.h.b16 %v574
    %v1146 = vunpack.c.l.b16 %v575
    %v1147 = vunpack.c.h.b16 %v575
    %v1148 = vunpack.c.l.b16 %v576
    %v1149 = vunpack.c.h.b16 %v576
    %v1150 = vunpack.c.l.b16 %v577
    %v1151 = vunpack.c.h.b16 %v577
    %v1152 = vunpack.c.l.b16 %v578
    %v1153 = vunpack.c.h.b16 %v578
    %v1154 = vunpack.c.l.b16 %v579
    %v1155 = vunpack.c.h.b16 %v579
    %v1156 = vunpack.c.l.b16 %v580
    %v1157 = vunpack.c.h.b16 %v580
    %v1158 = vunpack.c.l.b16 %v581
    %v1159 = vunpack.c.h.b16 %v581
    %v1160 = vunpack.c.l.b16 %v582
    %v1161 = vunpack.c.h.b16 %v582
    %v1162 = vunpack.c.l.b16 %v583
    %v1163 = vunpack.c.h.b16 %v583
    %v1164 = vunpack.c.l.b16 %v584
    %v1165 = vunpack.c.h.b16 %v584
    %v1166 = vunpack.c.l.b16 %v585
    %v1167 = vunpack.c.h.b16 %v585
    %v1168 = vunpack.c.l.b16 %v586
    %v1169 = vunpack.c.h.b16 %v586
    %v1170 = vunpack.c.l.b16 %v587
    %v1171 = vunpack.c.h.b16 %v587
    %v1172 = vunpack.c.l.b16 %v588
    %v1173 = vunpack.c.h.b16 %v588
    %v1174 = vunpack.c.l.b16 %v589
    %v1175 = vunpack.c.h.b16 %v589
    %v1176 = vunpack.c.l.b16 %v590
    %v1177 = vunpack.c.h.b16 %v590
    %v1178 = vunpack.c.l.b16 %v591
    %v1179 = vunpack.c.h.b16 %v591
    %v1180 = vunpack.c.l.b16 %v592
    %v1181 = vunpack.c.h.b16 %v592
    %v1182 = vunpack.c.l.b16 %v593
    %v1183 = vunpack.c.h.b16 %v593
    %v1184 = vunpack.c.l.b16 %v594
    %v1185 = vunpack.c.h.b16 %v594
    %v1186 = vunpack.c.l.b16 %v595
    %v1187 = vunpack.c.h.b16 %v595
    %v1188 = vunpack.c.l.b16 %v596
    %v1189 = vunpack.c.h.b16 %v596
    %v1190 = vunpack.c.l.b16 %v597
    %v1191 = vunpack.c.h.b16 %v597
    %v1192 = vunpack.c.l.b16 %v598
    %v1193 = vunpack.c.h.b16 %v598
    %v1194 = vunpack.c.l.b16 %v599
    %v1195 = vunpack.c.h.b16 %v599
    %v1196 = vunpack.c.l.b16 %v600
    %v1197 = vunpack.c.h.b16 %v600
    %v1198 = vunpack.c.l.b16 %v601
    %v1199 = vunpack.c.h.b16 %v601
    %v1200 = vunpack.c.l.b16 %v602
    %v1201 = vunpack.c.h.b16 %v602
    %v1202 = vunpack.c.l.b16 %v603
    %v1203 = vunpack.c.h.b16 %v603
    %v1204 = vunpack.c.l.b16 %v604
    %v1205 = vunpack.c.h.b16 %v604
    %v1206 = vunpack.c.l.b16 %v605
    %v1207 = vunpack.c.h.b16 %v605
    %v1208 = vunpack.c.l.b16 %v606
    %v1209 = vunpack.c.h.b16 %v606
    %v1210 = vunpack.c.l.b16 %v607
    %v1211 = vunpack.c.h.b16 %v607
    %v1212 = vunpack.c.l.b16 %v608
    %v1213 = vunpack.c.h.b16 %v608
    %v1214 = vunpack.c.l.b16 %v609
    %v1215 = vunpack.c.h.b16 %v609
    %v1216 = vunpack.c.l.b16 %v610
    %v1217 = vunpack.c.h.b16 %v610
    %v1218 = vunpack.c.l.b16 %v611
    %v1219 = vunpack.c.h.b16 %v611
    %v1220 = vunpack.c.l.b16 %v612
    %v1221 = vunpack.c.h.b16 %v612
    %v1222 = vunpack.c.l.b16 %v613
    %v1223 = vunpack.c.h.b16 %v613
    %v1224 = vunpack.c.l.b16 %v614
    %v1225 = vunpack.c.h.b16 %v614
    %v1226 = vunpack.c.l.b16 %v615
    %v1227 = vunpack.c.h.b16 %v615
    %v1228 = vunpack.c.l.b16 %v616
    %v1229 = vunpack.c.h.b16 %v616
    %v1230 = vunpack.c.l.b16 %v617
    %v1231 = vunpack.c.h.b16 %v617
    %v1232 = vunpack.c.l.b16 %v618
    %v1233 = vunpack.c.h.b16 %v618
    %v1234 = vunpack.c.l.b16 %v619
    %v1235 = vunpack.c.h.b16 %v619
    %v1236 = vunpack.c.l.b16 %v620
    %v1237 = vunpack.c.h.b16 %v620
    %v1238 = vunpack.c.l.b16 %v621
    %v1239 = vunpack.c.h.b16 %v621
    %v1240 = vunpack.c.l.b16 %v622
    %v1241 = vunpack.c.h.b16 %v622
    %v1242 = vunpack.c.l.b16 %v623
    %v1243 = vunpack.c.h.b16 %v623
    %v1244 = vunpack.c.l.b16 %v624
    %v1245 = vunpack.c.h.b16 %v624
    %v1246 = vunpack.c.l.b16 %v625
    %v1247 = vunpack.c.h.b16 %v625
    %v1248 = vunpack.c.l.b16 %v626
    %v1249 = vunpack.c.h.b16 %v626
    %v1250 = vunpack.c.l.b16 %v627
    %v1251 = vunpack.c.h.b16 %v627
    %v1252 = vunpack.c.l.b16 %v628
    %v1253 = vunpack.c.h.b16 %v628
    %v1254 = vunpack.c.l.b16 %v629
    %v1255 = vunpack.c.h.b16 %v629
    %v1256 = vunpack.c.l.b16 %v630
    %v1257 = vunpack.c.h.b16 %v630
    %v1258 = vunpack.c.l.b16 %v631
    %v1259 = vunpack.c.h.b16 %v631
    %v1260 = vunpack.c.l.b16 %v632
    %v1261 = vunpack.c.h.b16 %v632
    %v1262 = vunpack.c.l.b16 %v633
    %v1263 = vunpack.c.h.b16 %v633
    %v1264 = vunpack.c.l.b16 %v634
    %v1265 = vunpack.c.h.b16 %v634
    %v1266 = vunpack.c.l.b16 %v635
    %v1267 = vunpack.c.h.b16 %v635
    %v1268 = vunpack.c.l.b16 %v636
    %v1269 = vunpack.c.h.b16 %v636
    %v1270 = vunpack.c.l.b16 %v637
    %v1271 = vunpack.c.h.b16 %v637
    %v1272 = vunpack.c.l.b16 %v638
    %v1273 = vunpack.c.h.b16 %v638
    %v1274 = vunpack.c.l.b16 %v639
    %v1275 = vunpack.c.h.b16 %v639
    %v1276 = vunpack.c.l.b16 %v640
    %v1277 = vunpack.c.h.b16 %v640
    %v1278 = vunpack.c.l.b16 %v641
    %v1279 = vunpack.c.h.b16 %v641
    %v1280 = vunpack.c.l.b16 %v642
    %v1281 = vunpack.c.h.b16 %v642
    %v1282 = vunpack.c.l.b16 %v643
    %v1283 = vunpack.c.h.b16 %v643
    %v1284 = vunpack.c.l.b16 %v644
    %v1285 = vunpack.c.h.b16 %v644
    %v1286 = vunpack.c.l.b16 %v645
    %v1287 = vunpack.c.h.b16 %v645
    %v1288 = vunpack.c.l.b16 %v646
    %v1289 = vunpack.c.h.b16 %v646
    %v1290 = vunpack.c.l.b16 %v647
    %v1291 = vunpack.c.h.b16 %v647
    %v1292 = vunpack.c.l.b16 %v648
    %v1293 = vunpack.c.h.b16 %v648
    %v1294 = vunpack.c.l.b16 %v649
    %v1295 = vunpack.c.h.b16 %v649
    %v1296 = vunpack.c.l.b16 %v650
    %v1297 = vunpack.c.h.b16 %v650
    %v1298 = vunpack.c.l.b16 %v651
    %v1299 = vunpack.c.h.b16 %v651
    %v1300 = vunpack.c.l.b16 %v652
    %v1301 = vunpack.c.h.b16 %v652
    %v1302 = vunpack.c.l.b16 %v653
    %v1303 = vunpack.c.h.b16 %v653
    %v1304 = vunpack.c.l.b16 %v654
    %v1305 = vunpack.c.h.b16 %v654
    %v1306 = vunpack.c.l.b16 %v655
    %v1307 = vunpack.c.h.b16 %v655
    %v1308 = vunpack.c.l.b16 %v656
    %v1309 = vunpack.c.h.b16 %v656
    %v1310 = vunpack.c.l.b16 %v657
    %v1311 = vunpack.c.h.b16 %v657
    %v1312 = vunpack.c.l.b16 %v658
    %v1313 = vunpack.c.h.b16 %v658
    %v1314 = vunpack.c.l.b16 %v659
    %v1315 = vunpack.c.h.b16 %v659
    %v1316 = vunpack.c.l.b16 %v660
    %v1317 = vunpack.c.h.b16 %v660
    %v1318 = vunpack.c.l.b16 %v661
    %v1319 = vunpack.c.h.b16 %v661
    %v1320 = vunpack.c.l.b16 %v662
    %v1321 = vunpack.c.h.b16 %v662
    %v1322 = vunpack.c.l.b16 %v663
    %v1323 = vunpack.c.h.b16 %v663
    %v1324 = vunpack.c.l.b16 %v664
    %v1325 = vunpack.c.h.b16 %v664
    %v1326 = vunpack.c.l.b16 %v665
    %v1327 = vunpack.c.h.b16 %v665
    %v1328 = vunpack.c.l.b16 %v666
    %v1329 = vunpack.c.h.b16 %v666
    %v1330 = vunpack.c.l.b16 %v667
    %v1331 = vunpack.c.h.b16 %v667
    %v1332 = vunpack.c.l.b16 %v668
    %v1333 = vunpack.c.h.b16 %v668
    %v1334 = vunpack.c.l.b16 %v669
    %v1335 = vunpack.c.h.b16 %v669
    %v1336 = vunpack.c.l.b16 %v670
    %v1337 = vunpack.c.h.b16 %v670
    %v1338 = vunpack.c.l.b16 %v671
    %v1339 = vunpack.c.h.b16 %v671
    %v1340 = vunpack.c.l.b16 %v672
    %v1341 = vunpack.c.h.b16 %v672
    %v1342 = vunpack.c.l.b16 %v673
    %v1343 = vunpack.c.h.b16 %v673
    %v1344 = vunpack.c.l.b16 %v674
    %v1345 = vunpack.c.h.b16 %v674
    %v1346 = vunpack.c.l.b16 %v675
    %v1347 = vunpack.c.h.b16 %v675
    %v1348 = vunpack.c.l.b16 %v676
    %v1349 = vunpack.c.h.b16 %v676
    %v1350 = vunpack.c.l.b16 %v677
    %v1351 = vunpack.c.h.b16 %v677
    %v1352 = vunpack.c.l.b16 %v678
    %v1353 = vunpack.c.h.b16 %v678
    %v1354 = vunpack.c.l.b16 %v679
    %v1355 = vunpack.c.h.b16 %v679
    %v1356 = vunpack.c.l.b16 %v680
    %v1357 = vunpack.c.h.b16 %v680
    %v1358 = vunpack.c.l.b16 %v681
    %v1359 = vunpack.c.h.b16 %v681
    %v1360 = vunpack.c.l.b16 %v682
    %v1361 = vunpack.c.h.b16 %v682
    %v1362 = vunpack.c.l.b16 %v683
    %v1363 = vunpack.c.h.b16 %v683
    %v1364 = vunpack.c.l.b16 %v684
    %v1365 = vunpack.c.h.b16 %v684
    %v1366 = vunpack.c.l.b16 %v685
    %v1367 = vunpack.c.h.b16 %v685
    %v1368 = vunpack.c.l.b16 %v686
    %v1369 = vunpack.c.h.b16 %v686
    %v1370 = vunpack.c.l.b16 %v687
    %v1371 = vunpack.c.h.b16 %v687
    %v1372 = vunpack.c.l.b16 %v688
    %v1373 = vunpack.c.h.b16 %v688
    %v1374 = vunpack.c.l.b16 %v689
    %v1375 = vunpack.c.h.b16 %v689
    %v1376 = vunpack.c.l.b16 %v690
    %v1377 = vunpack.c.h.b16 %v690
    %v1378 = vunpack.c.l.b16 %v691
    %v1379 = vunpack.c.h.b16 %v691
    %v1380 = vunpack.c.l.b16 %v692
    %v1381 = vunpack.c.h.b16 %v692
    %v1382 = vunpack.c.l.b16 %v693
    %v1383 = vunpack.c.h.b16 %v693
    %v1384 = vunpack.c.l.b16 %v694
    %v1385 = vunpack.c.h.b16 %v694
    %v1386 = vunpack.c.l.b16 %v695
    %v1387 = vunpack.c.h.b16 %v695
    %v1388 = vunpack.c.l.b16 %v696
    %v1389 = vunpack.c.h.b16 %v696
    %v1390 = vunpack.c.l.b16 %v697
    %v1391 = vunpack.c.h.b16 %v697
    %v1392 = vunpack.c.l.b16 %v698
    %v1393 = vunpack.c.h.b16 %v698
    %v1394 = vunpack.c.l.b16 %v699
    %v1395 = vunpack.c.h.b16 %v699
    %v1396 = vunpack.c.l.b16 %v700
    %v1397 = vunpack.c.h.b16 %v700
    %v1398 = vunpack.c.l.b16 %v701
    %v1399 = vunpack.c.h.b16 %v701
    %v1400 = vunpack.c.l.b16 %v702
    %v1401 = vunpack.c.h.b16 %v702
    %v1402 = vunpack.c.l.b16 %v703
    %v1403 = vunpack.c.h.b16 %v703
    %v1404 = vunpack.c.l.b16 %v704
    %v1405 = vunpack.c.h.b16 %v704
    %v1406 = vunpack.c.l.b16 %v705
    %v1407 = vunpack.c.h.b16 %v705
    %v1408 = vunpack.c.l.b16 %v706
    %v1409 = vunpack.c.h.b16 %v706
    %v1410 = vunpack.c.l.b16 %v707
    %v1411 = vunpack.c.h.b16 %v707
    %v1412 = vunpack.c.l.b16 %v708
    %v1413 = vunpack.c.h.b16 %v708
    %v1414 = vunpack.c.l.b16 %v709
    %v1415 = vunpack.c.h.b16 %v709
    %v1416 = vunpack.c.l.b16 %v710
    %v1417 = vunpack.c.h.b16 %v710
    %v1418 = vunpack.c.l.b16 %v711
    %v1419 = vunpack.c.h.b16 %v711
    %v1420 = vunpack.c.l.b16 %v712
    %v1421 = vunpack.c.h.b16 %v712
    %v1422 = vunpack.c.l.b16 %v713
    %v1423 = vunpack.c.h.b16 %v713
    %v1424 = vunpack.c.l.b16 %v714
    %v1425 = vunpack.c.h.b16 %v714
    %v1426 = vunpack.c.l.b16 %v715
    %v1427 = vunpack.c.h.b16 %v715
    %v1428 = vunpack.c.l.b16 %v716
    %v1429 = vunpack.c.h.b16 %v716
    %v1430 = vunpack.c.l.b16 %v717
    %v1431 = vunpack.c.h.b16 %v717
    %v1432 = vunpack.c.l.b16 %v718
    %v1433 = vunpack.c.h.b16 %v718
    %v1434 = vunpack.c.l.b16 %v719
    %v1435 = vunpack.c.h.b16 %v719
    %v1436 = vunpack.c.l.b16 %v720
    %v1437 = vunpack.c.h.b16 %v720
    %v1438 = vunpack.c.l.b16 %v721
    %v1439 = vunpack.c.h.b16 %v721
    %v1440 = vunpack.c.l.b16 %v722
    %v1441 = vunpack.c.h.b16 %v722
    %v1442 = vunpack.c.l.b16 %v723
    %v1443 = vunpack.c.h.b16 %v723
    %v1444 = vunpack.c.l.b16 %v724
    %v1445 = vunpack.c.h.b16 %v724
    %v1446 = vunpack.c.l.b16 %v725
    %v1447 = vunpack.c.h.b16 %v725
    %v1448 = vunpack.c.l.b16 %v726
    %v1449 = vunpack.c.h.b16 %v726
    %v1450 = vunpack.c.l.b16 %v727
    %v1451 = vunpack.c.h.b16 %v727
    %v1452 = vunpack.c.l.b16 %v728
    %v1453 = vunpack.c.h.b16 %v728
    %v1454 = vunpack.c.l.b16 %v729
    %v1455 = vunpack.c.h.b16 %v729
    %v1456 = vunpack.c.l.b16 %v730
    %v1457 = vunpack.c.h.b16 %v730
    %v1458 = vunpack.c.l.b16 %v731
    %v1459 = vunpack.c.h.b16 %v731
    %v1460 = vunpack.c.l.b16 %v732
    %v1461 = vunpack.c.h.b16 %v732
    %v1462 = vunpack.c.l.b16 %v733
    %v1463 = vunpack.c.h.b16 %v733
    %v1464 = vunpack.c.l.b16 %v734
    %v1465 = vunpack.c.h.b16 %v734
    %v1466 = vunpack.c.l.b16 %v735
    %v1467 = vunpack.c.h.b16 %v735
    %v1468 = vunpack.c.l.b16 %v736
    %v1469 = vunpack.c.h.b16 %v736
    %v1470 = vunpack.c.l.b16 %v737
    %v1471 = vunpack.c.h.b16 %v737
    %v1472 = vunpack.c.l.b16 %v738
    %v1473 = vunpack.c.h.b16 %v738
    %v1474 = vunpack.c.l.b16 %v739
    %v1475 = vunpack.c.h.b16 %v739
    %v1476 = vunpack.c.l.b16 %v740
    %v1477 = vunpack.c.h.b16 %v740
    %v1478 = vunpack.c.l.b16 %v741
    %v1479 = vunpack.c.h.b16 %v741
    %v1480 = vunpack.c.l.b16 %v742
    %v1481 = vunpack.c.h.b16 %v742
    %v1482 = vunpack.c.l.b16 %v743
    %v1483 = vunpack.c.h.b16 %v743
    %v1484 = vunpack.c.l.b16 %v744
    %v1485 = vunpack.c.h.b16 %v744
    %v1486 = vunpack.c.l.b16 %v745
    %v1487 = vunpack.c.h.b16 %v745
    %v1488 = vunpack.c.l.b16 %v746
    %v1489 = vunpack.c.h.b16 %v746
    %v1490 = vunpack.c.l.b16 %v747
    %v1491 = vunpack.c.h.b16 %v747
    %v1492 = vunpack.c.l.b16 %v748
    %v1493 = vunpack.c.h.b16 %v748
    %v1494 = vunpack.c.l.b16 %v749
    %v1495 = vunpack.c.h.b16 %v749
    %v1496 = vunpack.c.l.b16 %v750
    %v1497 = vunpack.c.h.b16 %v750
    %v1498 = vunpack.c.l.b16 %v751
    %v1499 = vunpack.c.h.b16 %v751
    %v1500 = vunpack.c.l.b16 %v752
    %v1501 = vunpack.c.h.b16 %v752
    %v1502 = vunpack.c.l.b16 %v753
    %v1503 = vunpack.c.h.b16 %v753
    %v1504 = vunpack.c.l.b16 %v754
    %v1505 = vunpack.c.h.b16 %v754
    %v1506 = vunpack.c.l.b16 %v755
    %v1507 = vunpack.c.h.b16 %v755
    %v1508 = vunpack.c.l.b16 %v756
    %v1509 = vunpack.c.h.b16 %v756
    %v1510 = vunpack.c.l.b16 %v757
    %v1511 = vunpack.c.h.b16 %v757
    %v1512 = vunpack.c.l.b16 %v758
    %v1513 = vunpack.c.h.b16 %v758
    %v1514 = vunpack.c.l.b16 %v759
    %v1515 = vunpack.c.h.b16 %v759
    %v1516 = vunpack.c.l.b16 %v760
    %v1517 = vunpack.c.h.b16 %v760
    %v1518 = vunpack.c.l.b16 %v761
    %v1519 = vunpack.c.h.b16 %v761
    %v1520 = vunpack.c.l.b16 %v762
    %v1521 = vunpack.c.h.b16 %v762
    %v1522 = vunpack.c.l.b16 %v763
    %v1523 = vunpack.c.h.b16 %v763
    %v1524 = vunpack.c.l.b16 %v764
    %v1525 = vunpack.c.h.b16 %v764
    %v1526 = vunpack.c.l.b16 %v765
    %v1527 = vunpack.c.h.b16 %v765
    %v1528 = vunpack.c.l.b16 %v766
    %v1529 = vunpack.c.h.b16 %v766
    %v1530 = vunpack.c.l.b16 %v767
    %v1531 = vunpack.c.h.b16 %v767
    %v1532 = vunpack.c.l.b16 %v768
    %v1533 = vunpack.c.h.b16 %v768
    %v1534 = vunpack.c.l.b16 %v769
    %v1535 = vunpack.c.h.b16 %v769
    %v1536 = vunpack.c.l.b16 %v770
    %v1537 = vunpack.c.h.b16 %v770
    %v1538 = vunpack.c.l.b16 %v771
    %v1539 = vunpack.c.h.b16 %v771
    %v1540 = vunpack.c.l.b16 %v772
    %v1541 = vunpack.c.h.b16 %v772
    %v1542 = vunpack.c.l.b16 %v773
    %v1543 = vunpack.c.h.b16 %v773
    %v1544 = vunpack.c.l.b16 %v774
    %v1545 = vunpack.c.h.b16 %v774
    %v1546 = vunpack.c.l.b16 %v775
    %v1547 = vunpack.c.h.b16 %v775
    %v1548 = vunpack.c.l.b16 %v776
    %v1549 = vunpack.c.h.b16 %v776
    %v1550 = vunpack.c.l.b16 %v777
    %v1551 = vunpack.c.h.b16 %v777
    %v1552 = vunpack.c.l.b16 %v778
    %v1553 = vunpack.c.h.b16 %v778
    %v1554 = vunpack.c.l.b16 %v779
    %v1555 = vunpack.c.h.b16 %v779
    %v1556 = vunpack.c.l.b16 %v780
    %v1557 = vunpack.c.h.b16 %v780
    %v1558 = vunpack.c.l.b16 %v781
    %v1559 = vunpack.c.h.b16 %v781
    %v1560 = vunpack.c.l.b16 %v782
    %v1561 = vunpack.c.h.b16 %v782
    %v1562 = vunpack.c.l.b16 %v783
    %v1563 = vunpack.c.h.b16 %v783
    %v1564 = vunpack.c.l.b16 %v784
    %v1565 = vunpack.c.h.b16 %v784
    %v1566 = vunpack.c.l.b16 %v785
    %v1567 = vunpack.c.h.b16 %v785
    %v1568 = vunpack.c.l.b16 %v786
    %v1569 = vunpack.c.h.b16 %v786
    %v1570 = vunpack.c.l.b16 %v787
    %v1571 = vunpack.c.h.b16 %v787
    %v1572 = vunpack.c.l.b16 %v788
    %v1573 = vunpack.c.h.b16 %v788
    %v1574 = vunpack.c.l.b16 %v789
    %v1575 = vunpack.c.h.b16 %v789
    %v1576 = vunpack.c.l.b16 %v790
    %v1577 = vunpack.c.h.b16 %v790
    %v1578 = vunpack.c.l.b16 %v791
    %v1579 = vunpack.c.h.b16 %v791
    %v1580 = vunpack.c.l.b16 %v792
    %v1581 = vunpack.c.h.b16 %v792
    %v1582 = vunpack.c.l.b16 %v793
    %v1583 = vunpack.c.h.b16 %v793
    %v1584 = vpack.c.b16 %v1076, %v1072
    %v1585 = vpack.c.b16 %v1077, %v1073
    %v1586 = vpack.c.b16 %v1078, %v1074
    %v1587 = vpack.c.b16 %v1079, %v1075
    %v1588 = vpack.c.b16 %v1084, %v1080
    %v1589 = vpack.c.b16 %v1085, %v1081
    %v1590 = vpack.c.b16 %v1086, %v1082
    %v1591 = vpack.c.b16 %v1087, %v1083
    %v1592 = vpack.c.b16 %v1092, %v1088
    %v1593 = vpack.c.b16 %v1093, %v1089
    %v1594 = vpack.c.b16 %v1094, %v1090
    %v1595 = vpack.c.b16 %v1095, %v1091
    %v1596 = vpack.c.b16 %v1100, %v1096
    %v1597 = vpack.c.b16 %v1101, %v1097
    %v1598 = vpack.c.b16 %v1102, %v1098
    %v1599 = vpack.c.b16 %v1103, %v1099
    %v1600 = vpack.c.b16 %v1108, %v1104
    %v1601 = vpack.c.b16 %v1109, %v1105
    %v1602 = vpack.c.b16 %v1110, %v1106
    %v1603 = vpack.c.b16 %v1111, %v1107
    %v1604 = vpack.c.b16 %v1116, %v1112
    %v1605 = vpack.c.b16 %v1117, %v1113
    %v1606 = vpack.c.b16 %v1118, %v1114
    %v1607 = vpack.c.b16 %v1119, %v1115
    %v1608 = vpack.c.b16 %v1124, %v1120
    %v1609 = vpack.c.b16 %v1125, %v1121
    %v1610 = vpack.c.b16 %v1126, %v1122
    %v1611 = vpack.c.b16 %v1127, %v1123
    %v1612 = vpack.c.b16 %v1132, %v1128
    %v1613 = vpack.c.b16 %v1133, %v1129
    %v1614 = vpack.c.b16 %v1134, %v1130
    %v1615 = vpack.c.b16 %v1135, %v1131
    %v1616 = vpack.c.b16 %v1140, %v1136
    %v1617 = vpack.c.b16 %v1141, %v1137
    %v1618 = vpack.c.b16 %v1142, %v1138
    %v1619 = vpack.c.b16 %v1143, %v1139
    %v1620 = vpack.c.b16 %v1148, %v1144
    %v1621 = vpack.c.b16 %v1149, %v1145
    %v1622 = vpack.c.b16 %v1150, %v1146
    %v1623 = vpack.c.b16 %v1151, %v1147
    %v1624 = vpack.c.b16 %v1156, %v1152
    %v1625 = vpack.c.b16 %v1157, %v1153
    %v1626 = vpack.c.b16 %v1158, %v1154
    %v1627 = vpack.c.b16 %v1159, %v1155
    %v1628 = vpack.c.b16 %v1164, %v1160
    %v1629 = vpack.c.b16 %v1165, %v1161
    %v1630 = vpack.c.b16 %v1166, %v1162
    %v1631 = vpack.c.b16 %v1167, %v1163
    %v1632 = vpack.c.b16 %v1172, %v1168
    %v1633 = vpack.c.b16 %v1173, %v1169
    %v1634 = vpack.c.b16 %v1174, %v1170
    %v1635 = vpack.c.b16 %v1175, %v1171
    %v1636 = vpack.c.b16 %v1180, %v1176
    %v1637 = vpack.c.b16 %v1181, %v1177
    %v1638 = vpack.c.b16 %v1182, %v1178
    %v1639 = vpack.c.b16 %v1183, %v1179
    %v1640 = vpack.c.b16 %v1188, %v1184
    %v1641 = vpack.c.b16 %v1189, %v1185
    %v1642 = vpack.c.b16 %v1190, %v1186
    %v1643 = vpack.c.b16 %v1191, %v1187
    %v1644 = vpack.c.b16 %v1196, %v1192
    %v1645 = vpack.c.b16 %v1197, %v1193
    %v1646 = vpack.c.b16 %v1198, %v1194
    %v1647 = vpack.c.b16 %v1199, %v1195
    %v1648 = vpack.c.b16 %v1204, %v1200
    %v1649 = vpack.c.b16 %v1205, %v1201
    %v1650 = vpack.c.b16 %v1206, %v1202
    %v1651 = vpack.c.b16 %v1207, %v1203
    %v1652 = vpack.c.b16 %v1212, %v1208
    %v1653 = vpack.c.b16 %v1213, %v1209
    %v1654 = vpack.c.b16 %v1214, %v1210
    %v1655 = vpack.c.b16 %v1215, %v1211
    %v1656 = vpack.c.b16 %v1220, %v1216
    %v1657 = vpack.c.b16 %v1221, %v1217
    %v1658 = vpack.c.b16 %v1222, %v1218
    %v1659 = vpack.c.b16 %v1223, %v1219
    %v1660 = vpack.c.b16 %v1228, %v1224
    %v1661 = vpack.c.b16 %v1229, %v1225
    %v1662 = vpack.c.b16 %v1230, %v1226
    %v1663 = vpack.c.b16 %v1231, %v1227
    %v1664 = vpack.c.b16 %v1236, %v1232
    %v1665 = vpack.c.b16 %v1237, %v1233
    %v1666 = vpack.c.b16 %v1238, %v1234
    %v1667 = vpack.c.b16 %v1239, %v1235
    %v1668 = vpack.c.b16 %v1244, %v1240
    %v1669 = vpack.c.b16 %v1245, %v1241
    %v1670 = vpack.c.b16 %v1246, %v1242
    %v1671 = vpack.c.b16 %v1247, %v1243
    %v1672 = vpack.c.b16 %v1252, %v1248
    %v1673 = vpack.c.b16 %v1253, %v1249
    %v1674 = vpack.c.b16 %v1254, %v1250
    %v1675 = vpack.c.b16 %v1255, %v1251
    %v1676 = vpack.c.b16 %v1260, %v1256
    %v1677 = vpack.c.b16 %v1261, %v1257
    %v1678 = vpack.c.b16 %v1262, %v1258
    %v1679 = vpack.c.b16 %v1263, %v1259
    %v1680 = vpack.c.b16 %v1268, %v1264
    %v1681 = vpack.c.b16 %v1269, %v1265
    %v1682 = vpack.c.b16 %v1270, %v1266
    %v1683 = vpack.c.b16 %v1271, %v1267
    %v1684 = vpack.c.b16 %v1276, %v1272
    %v1685 = vpack.c.b16 %v1277, %v1273
    %v1686 = vpack.c.b16 %v1278, %v1274
    %v1687 = vpack.c.b16 %v1279, %v1275
    %v1688 = vpack.c.b16 %v1284, %v1280
    %v1689 = vpack.c.b16 %v1285, %v1281
    %v1690 = vpack.c.b16 %v1286, %v1282
    %v1691 = vpack.c.b16 %v1287, %v1283
    %v1692 = vpack.c.b16 %v1292, %v1288
    %v1693 = vpack.c.b16 %v1293, %v1289
    %v1694 = vpack.c.b16 %v1294, %v1290
    %v1695 = vpack.c.b16 %v1295, %v1291
    %v1696 = vpack.c.b16 %v1300, %v1296
    %v1697 = vpack.c.b16 %v1301, %v1297
    %v1698 = vpack.c.b16 %v1302, %v1298
    %v1699 = vpack.c.b16 %v1303, %v1299
    %v1700 = vpack.c.b16 %v1308, %v1304
    %v1701 = vpack.c.b16 %v1309, %v1305
    %v1702 = vpack.c.b16 %v1310, %v1306
    %v1703 = vpack.c.b16 %v1311, %v1307
    %v1704 = vpack.c.b16 %v1316, %v1312
    %v1705 = vpack.c.b16 %v1317, %v1313
    %v1706 = vpack.c.b16 %v1318, %v1314
    %v1707 = vpack.c.b16 %v1319, %v1315
    %v1708 = vpack.c.b16 %v1324, %v1320
    %v1709 = vpack.c.b16 %v1325, %v1321
    %v1710 = vpack.c.b16 %v1326, %v1322
    %v1711 = vpack.c.b16 %v1327, %v1323
    %v1712 = vpack.c.b16 %v1332, %v1328
    %v1713 = vpack.c.b16 %v1333, %v1329
    %v1714 = vpack.c.b16 %v1334, %v1330
    %v1715 = vpack.c.b16 %v1335, %v1331
    %v1716 = vpack.c.b16 %v1340, %v1336
    %v1717 = vpack.c.b16 %v1341, %v1337
    %v1718 = vpack.c.b16 %v1342, %v1338
    %v1719 = vpack.c.b16 %v1343, %v1339
    %v1720 = vpack.c.b16 %v1348, %v1344
    %v1721 = vpack.c.b16 %v1349, %v1345
    %v1722 = vpack.c.b16 %v1350, %v1346
    %v1723 = vpack.c.b16 %v1351, %v1347
    %v1724 = vpack.c.b16 %v1356, %v1352
    %v1725 = vpack.c.b16 %v1357, %v1353
    %v1726 = vpack.c.b16 %v1358, %v1354
    %v1727 = vpack.c.b16 %v1359, %v1355
    %v1728 = vpack.c.b16 %v1364, %v1360
    %v1729 = vpack.c.b16 %v1365, %v1361
    %v1730 = vpack.c.b16 %v1366, %v1362
    %v1731 = vpack.c.b16 %v1367, %v1363
    %v1732 = vpack.c.b16 %v1372, %v1368
    %v1733 = vpack.c.b16 %v1373, %v1369
    %v1734 = vpack.c.b16 %v1374, %v1370
    %v1735 = vpack.c.b16 %v1375, %v1371
    %v1736 = vpack.c.b16 %v1380, %v1376
    %v1737 = vpack.c.b16 %v1381, %v1377
    %v1738 = vpack.c.b16 %v1382, %v1378
    %v1739 = vpack.c.b16 %v1383, %v1379
    %v1740 = vpack.c.b16 %v1388, %v1384
    %v1741 = vpack.c.b16 %v1389, %v1385
    %v1742 = vpack.c.b16 %v1390, %v1386
    %v1743 = vpack.c.b16 %v1391, %v1387
    %v1744 = vpack.c.b16 %v1396, %v1392
    %v1745 = vpack.c.b16 %v1397, %v1393
    %v1746 = vpack.c.b16 %v1398, %v1394
    %v1747 = vpack.c.b16 %v1399, %v1395
    %v1748 = vpack.c.b16 %v1404, %v1400
    %v1749 = vpack.c.b16 %v1405, %v1401
    %v1750 = vpack.c.b16 %v1406, %v1402
    %v1751 = vpack.c.b16 %v1407, %v1403
    %v1752 = vpack.c.b16 %v1412, %v1408
    %v1753 = vpack.c.b16 %v1413, %v1409
    %v1754 = vpack.c.b16 %v1414, %v1410
    %v1755 = vpack.c.b16 %v1415, %v1411
    %v1756 = vpack.c.b16 %v1420, %v1416
    %v1757 = vpack.c.b16 %v1421, %v1417
    %v1758 = vpack.c.b16 %v1422, %v1418
    %v1759 = vpack.c.b16 %v1423, %v1419
    %v1760 = vpack.c.b16 %v1428, %v1424
    %v1761 = vpack.c.b16 %v1429, %v1425
    %v1762 = vpack.c.b16 %v1430, %v1426
    %v1763 = vpack.c.b16 %v1431, %v1427
    %v1764 = vpack.c.b16 %v1436, %v1432
    %v1765 = vpack.c.b16 %v1437, %v1433
    %v1766 = vpack.c.b16 %v1438, %v1434
    %v1767 = vpack.c.b16 %v1439, %v1435
    %v1768 = vpack.c.b16 %v1444, %v1440
    %v1769 = vpack.c.b16 %v1445, %v1441
    %v1770 = vpack.c.b16 %v1446, %v1442
    %v1771 = vpack.c.b16 %v1447, %v1443
    %v1772 = vpack.c.b16 %v1452, %v1448
    %v1773 = vpack.c.b16 %v1453, %v1449
    %v1774 = vpack.c.b16 %v1454, %v1450
    %v1775 = vpack.c.b16 %v1455, %v1451
    %v1776 = vpack.c.b16 %v1460, %v1456
    %v1777 = vpack.c.b16 %v1461, %v1457
    %v1778 = vpack.c.b16 %v1462, %v1458
    %v1779 = vpack.c.b16 %v1463, %v1459
    %v1780 = vpack.c.b16 %v1468, %v1464
    %v1781 = vpack.c.b16 %v1469, %v1465
    %v1782 = vpack.c.b16 %v1470, %v1466
    %v1783 = vpack.c.b16 %v1471, %v1467
    %v1784 = vpack.c.b16 %v1476, %v1472
    %v1785 = vpack.c.b16 %v1477, %v1473
    %v1786 = vpack.c.b16 %v1478, %v1474
    %v1787 = vpack.c.b16 %v1479, %v1475
    %v1788 = vpack.c.b16 %v1484, %v1480
    %v1789 = vpack.c.b16 %v1485, %v1481
    %v1790 = vpack.c.b16 %v1486, %v1482
    %v1791 = vpack.c.b16 %v1487, %v1483
    %v1792 = vpack.c.b16 %v1492, %v1488
    %v1793 = vpack.c.b16 %v1493, %v1489
    %v1794 = vpack.c.b16 %v1494, %v1490
    %v1795 = vpack.c.b16 %v1495, %v1491
    %v1796 = vpack.c.b16 %v1500, %v1496
    %v1797 = vpack.c.b16 %v1501, %v1497
    %v1798 = vpack.c.b16 %v1502, %v1498
    %v1799 = vpack.c.b16 %v1503, %v1499
    %v1800 = vpack.c.b16 %v1508, %v1504
    %v1801 = vpack.c.b16 %v1509, %v1505
    %v1802 = vpack.c.b16 %v1510, %v1506
    %v1803 = vpack.c.b16 %v1511, %v1507
    %v1804 = vpack.c.b16 %v1516, %v1512
    %v1805 = vpack.c.b16 %v1517, %v1513
    %v1806 = vpack.c.b16 %v1518, %v1514
    %v1807 = vpack.c.b16 %v1519, %v1515
    %v1808 = vpack.c.b16 %v1524, %v1520
    %v1809 = vpack.c.b16 %v1525, %v1521
    %v1810 = vpack.c.b16 %v1526, %v1522
    %v1811 = vpack.c.b16 %v1527, %v1523
    %v1812 = vpack.c.b16 %v1532, %v1528
    %v1813 = vpack.c.b16 %v1533, %v1529
    %v1814 = vpack.c.b16 %v1534, %v1530
    %v1815 = vpack.c.b16 %v1535, %v1531
    %v1816 = vpack.c.b16 %v1540, %v1536
    %v1817 = vpack.c.b16 %v1541, %v1537
    %v1818 = vpack.c.b16 %v1542, %v1538
    %v1819 = vpack.c.b16 %v1543, %v1539
    %v1820 = vpack.c.b16 %v1548, %v1544
    %v1821 = vpack.c.b16 %v1549, %v1545
    %v1822 = vpack.c.b16 %v1550, %v1546
    %v1823 = vpack.c.b16 %v1551, %v1547
    %v1824 = vpack.c.b16 %v1556, %v1552
    %v1825 = vpack.c.b16 %v1557, %v1553
    %v1826 = vpack.c.b16 %v1558, %v1554
    %v1827 = vpack.c.b16 %v1559, %v1555
    %v1828 = vpack.c.b16 %v1564, %v1560
    %v1829 = vpack.c.b16 %v1565, %v1561
    %v1830 = vpack.c.b16 %v1566, %v1562
    %v1831 = vpack.c.b16 %v1567, %v1563
    %v1832 = vpack.c.b16 %v1572, %v1568
    %v1833 = vpack.c.b16 %v1573, %v1569
    %v1834 = vpack.c.b16 %v1574, %v1570
    %v1835 = vpack.c.b16 %v1575, %v1571
    %v1836 = vpack.c.b16 %v1580, %v1576
    %v1837 = vpack.c.b16 %v1581, %v1577
    %v1838 = vpack.c.b16 %v1582, %v1578
    %v1839 = vpack.c.b16 %v1583, %v1579
    %2096 = vmatprep.subr.bf16.mxu0 %v1585
    %2097 = vmatpush1.bf16.msra.mxu0 %v1584
    %2098 = vmatprep.subr.bf16.mxu0 %v1589
    %2099 = vmatpush1.bf16.msra.mxu0 %v1588
    %2100 = vmatprep.subr.bf16.mxu0 %v1593
    %2101 = vmatpush1.bf16.msra.mxu0 %v1592
    %2102 = vmatprep.subr.bf16.mxu0 %v1597
    %2103 = vmatpush1.bf16.msra.mxu0 %v1596
    %2104 = vmatprep.subr.bf16.mxu0 %v1601
    %2105 = vmatpush1.bf16.msra.mxu0 %v1600
    %2106 = vmatprep.subr.bf16.mxu0 %v1605
    %2107 = vmatpush1.bf16.msra.mxu0 %v1604
    %2108 = vmatprep.subr.bf16.mxu0 %v1609
    %2109 = vmatpush1.bf16.msra.mxu0 %v1608
    %2110 = vmatprep.subr.bf16.mxu0 %v1613
    %2111 = vmatpush1.bf16.msra.mxu0 %v1612
    %2112 = vmatprep.subr.bf16.mxu0 %v1617
    %2113 = vmatpush1.bf16.msra.mxu0 %v1616
    %2114 = vmatprep.subr.bf16.mxu0 %v1621
    %2115 = vmatpush1.bf16.msra.mxu0 %v1620
    %2116 = vmatprep.subr.bf16.mxu0 %v1625
    %2117 = vmatpush1.bf16.msra.mxu0 %v1624
    %2118 = vmatprep.subr.bf16.mxu0 %v1629
    %2119 = vmatpush1.bf16.msra.mxu0 %v1628
    %2120 = vmatprep.subr.bf16.mxu0 %v1633
    %2121 = vmatpush1.bf16.msra.mxu0 %v1632
    %2122 = vmatprep.subr.bf16.mxu0 %v1637
    %2123 = vmatpush1.bf16.msra.mxu0 %v1636
    %2124 = vmatprep.subr.bf16.mxu0 %v1641
    %2125 = vmatpush1.bf16.msra.mxu0 %v1640
    %2126 = vmatprep.subr.bf16.mxu0 %v1645
    %2127 = vmatpush1.bf16.msra.mxu0 %v1644
    %2128 = vmatprep.mubr.bf16.mxu0 %v531
    %2129 = vmatmul.mubr.bf16.gmra.mrb[0].mxu0 %v530
    %v2130 = vpop.f32.mrb[0].mxu0
    %v2131 = vadd.f32 %v799, %v2130
    %v2132 = vpop.f32.mrb[0].mxu0
    %v2133 = vadd.f32 %v803, %v2132
    %v2134 = vpop.f32.mrb[0].mxu0
    %v2135 = vadd.f32 %v799, %v2134
    %v2136 = vpop.f32.mrb[0].mxu0
    %v2137 = vadd.f32 %v803, %v2136
    %2138 = vdwg.mxu0
    %2139 = vmatprep.subr.bf16.mxu0 %v1649
    %2140 = vmatpush1.bf16.msra.mxu0 %v1648
    %2141 = vmatprep.subr.bf16.mxu0 %v1653
    %2142 = vmatpush1.bf16.msra.mxu0 %v1652
    %2143 = vmatprep.subr.bf16.mxu0 %v1657
    %2144 = vmatpush1.bf16.msra.mxu0 %v1656
    %2145 = vmatprep.subr.bf16.mxu0 %v1661
    %2146 = vmatpush1.bf16.msra.mxu0 %v1660
    %2147 = vmatprep.subr.bf16.mxu0 %v1665
    %2148 = vmatpush1.bf16.msra.mxu0 %v1664
    %2149 = vmatprep.subr.bf16.mxu0 %v1669
    %2150 = vmatpush1.bf16.msra.mxu0 %v1668
    %2151 = vmatprep.subr.bf16.mxu0 %v1673
    %2152 = vmatpush1.bf16.msra.mxu0 %v1672
    %2153 = vmatprep.subr.bf16.mxu0 %v1677
    %2154 = vmatpush1.bf16.msra.mxu0 %v1676
    %2155 = vmatprep.subr.bf16.mxu0 %v1681
    %2156 = vmatpush1.bf16.msra.mxu0 %v1680
    %2157 = vmatprep.subr.bf16.mxu0 %v1685
    %2158 = vmatpush1.bf16.msra.mxu0 %v1684
    %2159 = vmatprep.subr.bf16.mxu0 %v1689
    %2160 = vmatpush1.bf16.msra.mxu0 %v1688
    %2161 = vmatprep.subr.bf16.mxu0 %v1693
    %2162 = vmatpush1.bf16.msra.mxu0 %v1692
    %2163 = vmatprep.subr.bf16.mxu0 %v1697
    %2164 = vmatpush1.bf16.msra.mxu0 %v1696
    %2165 = vmatprep.subr.bf16.mxu0 %v1701
    %2166 = vmatpush1.bf16.msra.mxu0 %v1700
    %2167 = vmatprep.subr.bf16.mxu0 %v1705
    %2168 = vmatpush1.bf16.msra.mxu0 %v1704
    %2169 = vmatprep.subr.bf16.mxu0 %v1709
    %2170 = vmatpush1.bf16.msra.mxu0 %v1708
    %2171 = vmatprep.mubr.bf16.mxu0 %v533
    %2172 = vmatmul.mubr.bf16.gmra.mrb[0].mxu0 %v532
    %v2173 = vpop.f32.mrb[0].mxu0
    %v2174 = vadd.f32 %v2131, %v2173
    %v2175 = vpop.f32.mrb[0].mxu0
    %v2176 = vadd.f32 %v2133, %v2175
    %v2177 = vpop.f32.mrb[0].mxu0
    %v2178 = vadd.f32 %v2135, %v2177
    %v2179 = vpop.f32.mrb[0].mxu0
    %v2180 = vadd.f32 %v2137, %v2179
    %2181 = vdwg.mxu0
    %2182 = vmatprep.subr.bf16.mxu0 %v1713
    %2183 = vmatpush1.bf16.msra.mxu0 %v1712
    %2184 = vmatprep.subr.bf16.mxu0 %v1717
    %2185 = vmatpush1.bf16.msra.mxu0 %v1716
    %2186 = vmatprep.subr.bf16.mxu0 %v1721
    %2187 = vmatpush1.bf16.msra.mxu0 %v1720
    %2188 = vmatprep.subr.bf16.mxu0 %v1725
    %2189 = vmatpush1.bf16.msra.mxu0 %v1724
    %2190 = vmatprep.subr.bf16.mxu0 %v1729
    %2191 = vmatpush1.bf16.msra.mxu0 %v1728
    %2192 = vmatprep.subr.bf16.mxu0 %v1733
    %2193 = vmatpush1.bf16.msra.mxu0 %v1732
    %2194 = vmatprep.subr.bf16.mxu0 %v1737
    %2195 = vmatpush1.bf16.msra.mxu0 %v1736
    %2196 = vmatprep.subr.bf16.mxu0 %v1741
    %2197 = vmatpush1.bf16.msra.mxu0 %v1740
    %2198 = vmatprep.subr.bf16.mxu0 %v1745
    %2199 = vmatpush1.bf16.msra.mxu0 %v1744
    %2200 = vmatprep.subr.bf16.mxu0 %v1749
    %2201 = vmatpush1.bf16.msra.mxu0 %v1748
    %2202 = vmatprep.subr.bf16.mxu0 %v1753
    %2203 = vmatpush1.bf16.msra.mxu0 %v1752
    %2204 = vmatprep.subr.bf16.mxu0 %v1757
    %2205 = vmatpush1.bf16.msra.mxu0 %v1756
    %2206 = vmatprep.subr.bf16.mxu0 %v1761
    %2207 = vmatpush1.bf16.msra.mxu0 %v1760
    %2208 = vmatprep.subr.bf16.mxu0 %v1765
    %2209 = vmatpush1.bf16.msra.mxu0 %v1764
    %2210 = vmatprep.subr.bf16.mxu0 %v1769
    %2211 = vmatpush1.bf16.msra.mxu0 %v1768
    %2212 = vmatprep.subr.bf16.mxu0 %v1773
    %2213 = vmatpush1.bf16.msra.mxu0 %v1772
    %2214 = vmatprep.mubr.bf16.mxu0 %v535
    %2215 = vmatmul.mubr.bf16.gmra.mrb[0].mxu0 %v534
    %v2216 = vpop.f32.mrb[0].mxu0
    %v2217 = vadd.f32 %v2174, %v2216
    %v2218 = vpop.f32.mrb[0].mxu0
    %v2219 = vadd.f32 %v2176, %v2218
    %v2220 = vpop.f32.mrb[0].mxu0
    %v2221 = vadd.f32 %v2178, %v2220
    %v2222 = vpop.f32.mrb[0].mxu0
    %v2223 = vadd.f32 %v2180, %v2222
    %2224 = vdwg.mxu0
    %2225 = vmatprep.subr.bf16.mxu0 %v1777
    %2226 = vmatpush1.bf16.msra.mxu0 %v1776
    %2227 = vmatprep.subr.bf16.mxu0 %v1781
    %2228 = vmatpush1.bf16.msra.mxu0 %v1780
    %2229 = vmatprep.subr.bf16.mxu0 %v1785
    %2230 = vmatpush1.bf16.msra.mxu0 %v1784
    %2231 = vmatprep.subr.bf16.mxu0 %v1789
    %2232 = vmatpush1.bf16.msra.mxu0 %v1788
    %2233 = vmatprep.subr.bf16.mxu0 %v1793
    %2234 = vmatpush1.bf16.msra.mxu0 %v1792
    %2235 = vmatprep.subr.bf16.mxu0 %v1797
    %2236 = vmatpush1.bf16.msra.mxu0 %v1796
    %2237 = vmatprep.subr.bf16.mxu0 %v1801
    %2238 = vmatpush1.bf16.msra.mxu0 %v1800
    %2239 = vmatprep.subr.bf16.mxu0 %v1805
    %2240 = vmatpush1.bf16.msra.mxu0 %v1804
    %2241 = vmatprep.subr.bf16.mxu0 %v1809
    %2242 = vmatpush1.bf16.msra.mxu0 %v1808
    %2243 = vmatprep.subr.bf16.mxu0 %v1813
    %2244 = vmatpush1.bf16.msra.mxu0 %v1812
    %2245 = vmatprep.subr.bf16.mxu0 %v1817
    %2246 = vmatpush1.bf16.msra.mxu0 %v1816
    %2247 = vmatprep.subr.bf16.mxu0 %v1821
    %2248 = vmatpush1.bf16.msra.mxu0 %v1820
    %2249 = vmatprep.subr.bf16.mxu0 %v1825
    %2250 = vmatpush1.bf16.msra.mxu0 %v1824
    %2251 = vmatprep.subr.bf16.mxu0 %v1829
    %2252 = vmatpush1.bf16.msra.mxu0 %v1828
    %2253 = vmatprep.subr.bf16.mxu0 %v1833
    %2254 = vmatpush1.bf16.msra.mxu0 %v1832
    %2255 = vmatprep.subr.bf16.mxu0 %v1837
    %2256 = vmatpush1.bf16.msra.mxu0 %v1836
    %2257 = vmatprep.mubr.bf16.mxu0 %v537
    %2258 = vmatmul.mubr.bf16.gmra.mrb[0].mxu0 %v536
    %v2259 = vpop.f32.mrb[0].mxu0
    %v2260 = vadd.f32 %v2217, %v2259
    %v2261 = vpop.f32.mrb[0].mxu0
    %v2262 = vadd.f32 %v2219, %v2261
    %v2263 = vpop.f32.mrb[0].mxu0
    %v2264 = vadd.f32 %v2221, %v2263
    %v2265 = vpop.f32.mrb[0].mxu0
    %v2266 = vadd.f32 %v2223, %v2265
    %2267 = vdwg.mxu0
    %2268 = vmatprep.subr.bf16.mxu0 %v1587
    %2269 = vmatpush1.bf16.msra.mxu0 %v1586
    %2270 = vmatprep.subr.bf16.mxu0 %v1591
    %2271 = vmatpush1.bf16.msra.mxu0 %v1590
    %2272 = vmatprep.subr.bf16.mxu0 %v1595
    %2273 = vmatpush1.bf16.msra.mxu0 %v1594
    %2274 = vmatprep.subr.bf16.mxu0 %v1599
    %2275 = vmatpush1.bf16.msra.mxu0 %v1598
    %2276 = vmatprep.subr.bf16.mxu0 %v1603
    %2277 = vmatpush1.bf16.msra.mxu0 %v1602
    %2278 = vmatprep.subr.bf16.mxu0 %v1607
    %2279 = vmatpush1.bf16.msra.mxu0 %v1606
    %2280 = vmatprep.subr.bf16.mxu0 %v1611
    %2281 = vmatpush1.bf16.msra.mxu0 %v1610
    %2282 = vmatprep.subr.bf16.mxu0 %v1615
    %2283 = vmatpush1.bf16.msra.mxu0 %v1614
    %2284 = vmatprep.subr.bf16.mxu0 %v1619
    %2285 = vmatpush1.bf16.msra.mxu0 %v1618
    %2286 = vmatprep.subr.bf16.mxu0 %v1623
    %2287 = vmatpush1.bf16.msra.mxu0 %v1622
    %2288 = vmatprep.subr.bf16.mxu0 %v1627
    %2289 = vmatpush1.bf16.msra.mxu0 %v1626
    %2290 = vmatprep.subr.bf16.mxu0 %v1631
    %2291 = vmatpush1.bf16.msra.mxu0 %v1630
    %2292 = vmatprep.subr.bf16.mxu0 %v1635
    %2293 = vmatpush1.bf16.msra.mxu0 %v1634
    %2294 = vmatprep.subr.bf16.mxu0 %v1639
    %2295 = vmatpush1.bf16.msra.mxu0 %v1638
    %2296 = vmatprep.subr.bf16.mxu0 %v1643
    %2297 = vmatpush1.bf16.msra.mxu0 %v1642
    %2298 = vmatprep.subr.bf16.mxu0 %v1647
    %2299 = vmatpush1.bf16.msra.mxu0 %v1646
    %2300 = vmatprep.mubr.bf16.mxu0 %v531
    %2301 = vmatmul.mubr.bf16.gmra.mrb[0].mxu0 %v530
    %v2302 = vpop.f32.mrb[0].mxu0
    %v2303 = vadd.f32 %v807, %v2302
    %v2304 = vpop.f32.mrb[0].mxu0
    %v2305 = vadd.f32 %v811, %v2304
    %v2306 = vpop.f32.mrb[0].mxu0
    %v2307 = vadd.f32 %v807, %v2306
    %v2308 = vpop.f32.mrb[0].mxu0
    %v2309 = vadd.f32 %v811, %v2308
    %2310 = vdwg.mxu0
    %2311 = vmatprep.subr.bf16.mxu0 %v1651
    %2312 = vmatpush1.bf16.msra.mxu0 %v1650
    %2313 = vmatprep.subr.bf16.mxu0 %v1655
    %2314 = vmatpush1.bf16.msra.mxu0 %v1654
    %2315 = vmatprep.subr.bf16.mxu0 %v1659
    %2316 = vmatpush1.bf16.msra.mxu0 %v1658
    %2317 = vmatprep.subr.bf16.mxu0 %v1663
    %2318 = vmatpush1.bf16.msra.mxu0 %v1662
    %2319 = vmatprep.subr.bf16.mxu0 %v1667
    %2320 = vmatpush1.bf16.msra.mxu0 %v1666
    %2321 = vmatprep.subr.bf16.mxu0 %v1671
    %2322 = vmatpush1.bf16.msra.mxu0 %v1670
    %2323 = vmatprep.subr.bf16.mxu0 %v1675
    %2324 = vmatpush1.bf16.msra.mxu0 %v1674
    %2325 = vmatprep.subr.bf16.mxu0 %v1679
    %2326 = vmatpush1.bf16.msra.mxu0 %v1678
    %2327 = vmatprep.subr.bf16.mxu0 %v1683
    %2328 = vmatpush1.bf16.msra.mxu0 %v1682
    %2329 = vmatprep.subr.bf16.mxu0 %v1687
    %2330 = vmatpush1.bf16.msra.mxu0 %v1686
    %2331 = vmatprep.subr.bf16.mxu0 %v1691
    %2332 = vmatpush1.bf16.msra.mxu0 %v1690
    %2333 = vmatprep.subr.bf16.mxu0 %v1695
    %2334 = vmatpush1.bf16.msra.mxu0 %v1694
    %2335 = vmatprep.subr.bf16.mxu0 %v1699
    %2336 = vmatpush1.bf16.msra.mxu0 %v1698
    %2337 = vmatprep.subr.bf16.mxu0 %v1703
    %2338 = vmatpush1.bf16.msra.mxu0 %v1702
    %2339 = vmatprep.subr.bf16.mxu0 %v1707
    %2340 = vmatpush1.bf16.msra.mxu0 %v1706
    %2341 = vmatprep.subr.bf16.mxu0 %v1711
    %2342 = vmatpush1.bf16.msra.mxu0 %v1710
    %2343 = vmatprep.mubr.bf16.mxu0 %v533
    %2344 = vmatmul.mubr.bf16.gmra.mrb[0].mxu0 %v532
    %v2345 = vpop.f32.mrb[0].mxu0
    %v2346 = vadd.f32 %v2303, %v2345
    %v2347 = vpop.f32.mrb[0].mxu0
    %v2348 = vadd.f32 %v2305, %v2347
    %v2349 = vpop.f32.mrb[0].mxu0
    %v2350 = vadd.f32 %v2307, %v2349
    %v2351 = vpop.f32.mrb[0].mxu0
    %v2352 = vadd.f32 %v2309, %v2351
    %2353 = vdwg.mxu0
    %2354 = vmatprep.subr.bf16.mxu0 %v1715
    %2355 = vmatpush1.bf16.msra.mxu0 %v1714
    %2356 = vmatprep.subr.bf16.mxu0 %v1719
    %2357 = vmatpush1.bf16.msra.mxu0 %v1718
    %2358 = vmatprep.subr.bf16.mxu0 %v1723
    %2359 = vmatpush1.bf16.msra.mxu0 %v1722
    %2360 = vmatprep.subr.bf16.mxu0 %v1727
    %2361 = vmatpush1.bf16.msra.mxu0 %v1726
    %2362 = vmatprep.subr.bf16.mxu0 %v1731
    %2363 = vmatpush1.bf16.msra.mxu0 %v1730
    %2364 = vmatprep.subr.bf16.mxu0 %v1735
    %2365 = vmatpush1.bf16.msra.mxu0 %v1734
    %2366 = vmatprep.subr.bf16.mxu0 %v1739
    %2367 = vmatpush1.bf16.msra.mxu0 %v1738
    %2368 = vmatprep.subr.bf16.mxu0 %v1743
    %2369 = vmatpush1.bf16.msra.mxu0 %v1742
    %2370 = vmatprep.subr.bf16.mxu0 %v1747
    %2371 = vmatpush1.bf16.msra.mxu0 %v1746
    %2372 = vmatprep.subr.bf16.mxu0 %v1751
    %2373 = vmatpush1.bf16.msra.mxu0 %v1750
    %2374 = vmatprep.subr.bf16.mxu0 %v1755
    %2375 = vmatpush1.bf16.msra.mxu0 %v1754
    %2376 = vmatprep.subr.bf16.mxu0 %v1759
    %2377 = vmatpush1.bf16.msra.mxu0 %v1758
    %2378 = vmatprep.subr.bf16.mxu0 %v1763
    %2379 = vmatpush1.bf16.msra.mxu0 %v1762
    %2380 = vmatprep.subr.bf16.mxu0 %v1767
    %2381 = vmatpush1.bf16.msra.mxu0 %v1766
    %2382 = vmatprep.subr.bf16.mxu0 %v1771
    %2383 = vmatpush1.bf16.msra.mxu0 %v1770
    %2384 = vmatprep.subr.bf16.mxu0 %v1775
    %2385 = vmatpush1.bf16.msra.mxu0 %v1774
    %2386 = vmatprep.mubr.bf16.mxu0 %v535
    %2387 = vmatmul.mubr.bf16.gmra.mrb[0].mxu0 %v534
    %v2388 = vpop.f32.mrb[0].mxu0
    %v2389 = vadd.f32 %v2346, %v2388
    %v2390 = vpop.f32.mrb[0].mxu0
    %v2391 = vadd.f32 %v2348, %v2390
    %v2392 = vpop.f32.mrb[0].mxu0
    %v2393 = vadd.f32 %v2350, %v2392
    %v2394 = vpop.f32.mrb[0].mxu0
    %v2395 = vadd.f32 %v2352, %v2394
    %2396 = vdwg.mxu0
    %2397 = vmatprep.subr.bf16.mxu0 %v1779
    %2398 = vmatpush1.bf16.msra.mxu0 %v1778
    %2399 = vmatprep.subr.bf16.mxu0 %v1783
    %2400 = vmatpush1.bf16.msra.mxu0 %v1782
    %2401 = vmatprep.subr.bf16.mxu0 %v1787
    %2402 = vmatpush1.bf16.msra.mxu0 %v1786
    %2403 = vmatprep.subr.bf16.mxu0 %v1791
    %2404 = vmatpush1.bf16.msra.mxu0 %v1790
    %2405 = vmatprep.subr.bf16.mxu0 %v1795
    %2406 = vmatpush1.bf16.msra.mxu0 %v1794
    %2407 = vmatprep.subr.bf16.mxu0 %v1799
    %2408 = vmatpush1.bf16.msra.mxu0 %v1798
    %2409 = vmatprep.subr.bf16.mxu0 %v1803
    %2410 = vmatpush1.bf16.msra.mxu0 %v1802
    %2411 = vmatprep.subr.bf16.mxu0 %v1807
    %2412 = vmatpush1.bf16.msra.mxu0 %v1806
    %2413 = vmatprep.subr.bf16.mxu0 %v1811
    %2414 = vmatpush1.bf16.msra.mxu0 %v1810
    %2415 = vmatprep.subr.bf16.mxu0 %v1815
    %2416 = vmatpush1.bf16.msra.mxu0 %v1814
    %2417 = vmatprep.subr.bf16.mxu0 %v1819
    %2418 = vmatpush1.bf16.msra.mxu0 %v1818
    %2419 = vmatprep.subr.bf16.mxu0 %v1823
    %2420 = vmatpush1.bf16.msra.mxu0 %v1822
    %2421 = vmatprep.subr.bf16.mxu0 %v1827
    %2422 = vmatpush1.bf16.msra.mxu0 %v1826
    %2423 = vmatprep.subr.bf16.mxu0 %v1831
    %2424 = vmatpush1.bf16.msra.mxu0 %v1830
    %2425 = vmatprep.subr.bf16.mxu0 %v1835
    %2426 = vmatpush1.bf16.msra.mxu0 %v1834
    %2427 = vmatprep.subr.bf16.mxu0 %v1839
    %2428 = vmatpush1.bf16.msra.mxu0 %v1838
    %2429 = vmatprep.mubr.bf16.mxu0 %v537
    %2430 = vmatmul.mubr.bf16.gmra.mrb[0].mxu0 %v536
    %v2431 = vpop.f32.mrb[0].mxu0
    %v2432 = vadd.f32 %v2389, %v2431
    %v2433 = vpop.f32.mrb[0].mxu0
    %v2434 = vadd.f32 %v2391, %v2433
    %v2435 = vpop.f32.mrb[0].mxu0
    %v2436 = vadd.f32 %v2393, %v2435
    %v2437 = vpop.f32.mrb[0].mxu0
    %v2438 = vadd.f32 %v2395, %v2437
    %2439 = vdwg.mxu0
    %v2440 = vpack.c.bf16 %v2264, %v2260
    %v2441 = vpack.c.bf16 %v2266, %v2262
    %v2442 = vpack.c.bf16 %v2436, %v2432
    %v2443 = vpack.c.bf16 %v2438, %v2434
    %v2444 = vmin.bf16 %v2440, 1101021600
    %v2445 = vmin.bf16 %v2441, 1101021600
    %v2446 = vmin.bf16 %v2442, 1101021600
    %v2447 = vmin.bf16 %v2443, 1101021600
    %v2449 = vmul.bf16 %v2444, 1069105081
    %v2450 = vpow.bf16.pop %v2449
    %v2452 = vmul.bf16 %v2445, 1069105081
    %v2453 = vpow.bf16.pop %v2452
    %v2455 = vmul.bf16 %v2446, 1069105081
    %v2456 = vpow.bf16.pop %v2455
    %v2458 = vmul.bf16 %v2447, 1069105081
    %v2459 = vpow.bf16.pop %v2458
    %v2460 = vadd.bf16 %v2450, 1073758208
    %v2461 = vadd.bf16 %v2453, 1073758208
    %v2462 = vadd.bf16 %v2456, 1073758208
    %v2463 = vadd.bf16 %v2459, 1073758208
    %v2464 = vmul.bf16 %v2450, %v2460
    %v2465 = vmul.bf16 %v2453, %v2461
    %v2466 = vmul.bf16 %v2456, %v2462
    %v2467 = vmul.bf16 %v2459, %v2463
    %v2468 = vadd.bf16 %v2464, 1073758208
    %v2469 = vadd.bf16 %v2465, 1073758208
    %v2470 = vadd.bf16 %v2466, 1073758208
    %v2471 = vadd.bf16 %v2467, 1073758208
    %v2472 = vrcp.bf16.pop %v2468
    %v2473 = vmul.bf16 %v2464, %v2472
    %v2474 = vrcp.bf16.pop %v2469
    %v2475 = vmul.bf16 %v2465, %v2474
    %v2476 = vrcp.bf16.pop %v2470
    %v2477 = vmul.bf16 %v2466, %v2476
    %v2478 = vrcp.bf16.pop %v2471
    %v2479 = vmul.bf16 %v2467, %v2478
    %v2480 = vmul.bf16 %v2440, %v2473
    %v2481 = vmul.bf16 %v2441, %v2475
    %v2482 = vmul.bf16 %v2442, %v2477
    %v2483 = vmul.bf16 %v2443, %v2479
    %v2484 = vld [vmem:[#allocation12] sm:$0xf]
    %v2485 = vld [vmem:[#allocation12 + $0x4] sm:$0xf]
    %v2486 = vld [vmem:[#allocation12 + $0x8] sm:$0xf]
    %v2487 = vld [vmem:[#allocation12 + $0xc] sm:$0xf]
    %v2488 = vld [vmem:[#allocation12 + $0x10] sm:$0xf]
    %v2489 = vld [vmem:[#allocation12 + $0x14] sm:$0xf]
    %v2490 = vld [vmem:[#allocation12 + $0x18] sm:$0xf]
    %v2491 = vld [vmem:[#allocation12 + $0x1c] sm:$0xf]
    %v2492 = vld [vmem:[#allocation12 + $0x20] sm:$0xf]
    %v2493 = vld [vmem:[#allocation12 + $0x24] sm:$0xf]
    %v2494 = vld [vmem:[#allocation12 + $0x28] sm:$0xf]
    %v2495 = vld [vmem:[#allocation12 + $0x2c] sm:$0xf]
    %v2496 = vld [vmem:[#allocation12 + $0x30] sm:$0xf]
    %v2497 = vld [vmem:[#allocation12 + $0x34] sm:$0xf]
    %v2498 = vld [vmem:[#allocation12 + $0x38] sm:$0xf]
    %v2499 = vld [vmem:[#allocation12 + $0x3c] sm:$0xf]
    %v2500 = vld [vmem:[#allocation12 + $0x40] sm:$0xf]
    %v2501 = vld [vmem:[#allocation12 + $0x44] sm:$0xf]
    %v2502 = vld [vmem:[#allocation12 + $0x48] sm:$0xf]
    %v2503 = vld [vmem:[#allocation12 + $0x4c] sm:$0xf]
    %v2504 = vld [vmem:[#allocation12 + $0x50] sm:$0xf]
    %v2505 = vld [vmem:[#allocation12 + $0x54] sm:$0xf]
    %v2506 = vld [vmem:[#allocation12 + $0x58] sm:$0xf]
    %v2507 = vld [vmem:[#allocation12 + $0x5c] sm:$0xf]
    %v2508 = vld [vmem:[#allocation12 + $0x60] sm:$0xf]
    %v2509 = vld [vmem:[#allocation12 + $0x64] sm:$0xf]
    %v2510 = vld [vmem:[#allocation12 + $0x68] sm:$0xf]
    %v2511 = vld [vmem:[#allocation12 + $0x6c] sm:$0xf]
    %v2512 = vld [vmem:[#allocation12 + $0x70] sm:$0xf]
    %v2513 = vld [vmem:[#allocation12 + $0x74] sm:$0xf]
    %v2514 = vld [vmem:[#allocation12 + $0x78] sm:$0xf]
    %v2515 = vld [vmem:[#allocation12 + $0x7c] sm:$0xf]
    %v2516 = vld [vmem:[#allocation12 + $0x80] sm:$0xf]
    %v2517 = vld [vmem:[#allocation12 + $0x84] sm:$0xf]
    %v2518 = vld [vmem:[#allocation12 + $0x88] sm:$0xf]
    %v2519 = vld [vmem:[#allocation12 + $0x8c] sm:$0xf]
    %v2520 = vld [vmem:[#allocation12 + $0x90] sm:$0xf]
    %v2521 = vld [vmem:[#allocation12 + $0x94] sm:$0xf]
    %v2522 = vld [vmem:[#allocation12 + $0x98] sm:$0xf]
    %v2523 = vld [vmem:[#allocation12 + $0x9c] sm:$0xf]
    %v2524 = vld [vmem:[#allocation12 + $0xa0] sm:$0xf]
    %v2525 = vld [vmem:[#allocation12 + $0xa4] sm:$0xf]
    %v2526 = vld [vmem:[#allocation12 + $0xa8] sm:$0xf]
    %v2527 = vld [vmem:[#allocation12 + $0xac] sm:$0xf]
    %v2528 = vld [vmem:[#allocation12 + $0xb0] sm:$0xf]
    %v2529 = vld [vmem:[#allocation12 + $0xb4] sm:$0xf]
    %v2530 = vld [vmem:[#allocation12 + $0xb8] sm:$0xf]
    %v2531 = vld [vmem:[#allocation12 + $0xbc] sm:$0xf]
    %v2532 = vld [vmem:[#allocation12 + $0xc0] sm:$0xf]
    %v2533 = vld [vmem:[#allocation12 + $0xc4] sm:$0xf]
    %v2534 = vld [vmem:[#allocation12 + $0xc8] sm:$0xf]
    %v2535 = vld [vmem:[#allocation12 + $0xcc] sm:$0xf]
    %v2536 = vld [vmem:[#allocation12 + $0xd0] sm:$0xf]
    %v2537 = vld [vmem:[#allocation12 + $0xd4] sm:$0xf]
    %v2538 = vld [vmem:[#allocation12 + $0xd8] sm:$0xf]
    %v2539 = vld [vmem:[#allocation12 + $0xdc] sm:$0xf]
    %v2540 = vld [vmem:[#allocation12 + $0xe0] sm:$0xf]
    %v2541 = vld [vmem:[#allocation12 + $0xe4] sm:$0xf]
    %v2542 = vld [vmem:[#allocation12 + $0xe8] sm:$0xf]
    %v2543 = vld [vmem:[#allocation12 + $0xec] sm:$0xf]
    %v2544 = vld [vmem:[#allocation12 + $0xf0] sm:$0xf]
    %v2545 = vld [vmem:[#allocation12 + $0xf4] sm:$0xf]
    %v2546 = vld [vmem:[#allocation12 + $0xf8] sm:$0xf]
    %v2547 = vld [vmem:[#allocation12 + $0xfc] sm:$0xf]
    %v2548 = vld [vmem:[%s8] sm:$0x1]
    %v2550 = vlaneseq
    %v2551 = vshrl.u32 %v2550, 7
    %v2552 = vsub.s32 0, %v2551
    %v2553 = vrot.slane %v2548, %v2552
    %v2619 = vunpack.c.l.b16 %v2484
    %v2620 = vunpack.c.l.b16 %v2485
    %v2621 = vunpack.c.l.b16 %v2486
    %v2622 = vunpack.c.l.b16 %v2487
    %v2623 = vunpack.c.l.b16 %v2488
    %v2624 = vunpack.c.l.b16 %v2489
    %v2625 = vunpack.c.l.b16 %v2490
    %v2626 = vunpack.c.l.b16 %v2491
    %v2627 = vunpack.c.l.b16 %v2492
    %v2628 = vunpack.c.l.b16 %v2493
    %v2629 = vunpack.c.l.b16 %v2494
    %v2630 = vunpack.c.l.b16 %v2495
    %v2631 = vunpack.c.l.b16 %v2496
    %v2632 = vunpack.c.l.b16 %v2497
    %v2633 = vunpack.c.l.b16 %v2498
    %v2634 = vunpack.c.l.b16 %v2499
    %v2635 = vunpack.c.l.b16 %v2500
    %v2636 = vunpack.c.l.b16 %v2501
    %v2637 = vunpack.c.l.b16 %v2502
    %v2638 = vunpack.c.l.b16 %v2503
    %v2639 = vunpack.c.l.b16 %v2504
    %v2640 = vunpack.c.l.b16 %v2505
    %v2641 = vunpack.c.l.b16 %v2506
    %v2642 = vunpack.c.l.b16 %v2507
    %v2643 = vunpack.c.l.b16 %v2508
    %v2644 = vunpack.c.l.b16 %v2509
    %v2645 = vunpack.c.l.b16 %v2510
    %v2646 = vunpack.c.l.b16 %v2511
    %v2647 = vunpack.c.l.b16 %v2512
    %v2648 = vunpack.c.l.b16 %v2513
    %v2649 = vunpack.c.l.b16 %v2514
    %v2650 = vunpack.c.l.b16 %v2515
    %v2651 = vunpack.c.l.b16 %v2516
    %v2652 = vunpack.c.l.b16 %v2517
    %v2653 = vunpack.c.l.b16 %v2518
    %v2654 = vunpack.c.l.b16 %v2519
    %v2655 = vunpack.c.l.b16 %v2520
    %v2656 = vunpack.c.l.b16 %v2521
    %v2657 = vunpack.c.l.b16 %v2522
    %v2658 = vunpack.c.l.b16 %v2523
    %v2659 = vunpack.c.l.b16 %v2524
    %v2660 = vunpack.c.l.b16 %v2525
    %v2661 = vunpack.c.l.b16 %v2526
    %v2662 = vunpack.c.l.b16 %v2527
    %v2663 = vunpack.c.l.b16 %v2528
    %v2664 = vunpack.c.l.b16 %v2529
    %v2665 = vunpack.c.l.b16 %v2530
    %v2666 = vunpack.c.l.b16 %v2531
    %v2667 = vunpack.c.l.b16 %v2532
    %v2668 = vunpack.c.l.b16 %v2533
    %v2669 = vunpack.c.l.b16 %v2534
    %v2670 = vunpack.c.l.b16 %v2535
    %v2671 = vunpack.c.l.b16 %v2536
    %v2672 = vunpack.c.l.b16 %v2537
    %v2673 = vunpack.c.l.b16 %v2538
    %v2674 = vunpack.c.l.b16 %v2539
    %v2675 = vunpack.c.l.b16 %v2540
    %v2676 = vunpack.c.l.b16 %v2541
    %v2677 = vunpack.c.l.b16 %v2542
    %v2678 = vunpack.c.l.b16 %v2543
    %v2679 = vunpack.c.l.b16 %v2544
    %v2680 = vunpack.c.l.b16 %v2545
    %v2681 = vunpack.c.l.b16 %v2546
    %v2682 = vunpack.c.l.b16 %v2547
    %v2683 = vpack.c.b16 %v2620, %v2619
    %v2684 = vpack.c.b16 %v2622, %v2621
    %v2685 = vpack.c.b16 %v2624, %v2623
    %v2686 = vpack.c.b16 %v2626, %v2625
    %v2687 = vpack.c.b16 %v2628, %v2627
    %v2688 = vpack.c.b16 %v2630, %v2629
    %v2689 = vpack.c.b16 %v2632, %v2631
    %v2690 = vpack.c.b16 %v2634, %v2633
    %v2691 = vpack.c.b16 %v2636, %v2635
    %v2692 = vpack.c.b16 %v2638, %v2637
    %v2693 = vpack.c.b16 %v2640, %v2639
    %v2694 = vpack.c.b16 %v2642, %v2641
    %v2695 = vpack.c.b16 %v2644, %v2643
    %v2696 = vpack.c.b16 %v2646, %v2645
    %v2697 = vpack.c.b16 %v2648, %v2647
    %v2698 = vpack.c.b16 %v2650, %v2649
    %v2699 = vpack.c.b16 %v2652, %v2651
    %v2700 = vpack.c.b16 %v2654, %v2653
    %v2701 = vpack.c.b16 %v2656, %v2655
    %v2702 = vpack.c.b16 %v2658, %v2657
    %v2703 = vpack.c.b16 %v2660, %v2659
    %v2704 = vpack.c.b16 %v2662, %v2661
    %v2705 = vpack.c.b16 %v2664, %v2663
    %v2706 = vpack.c.b16 %v2666, %v2665
    %v2707 = vpack.c.b16 %v2668, %v2667
    %v2708 = vpack.c.b16 %v2670, %v2669
    %v2709 = vpack.c.b16 %v2672, %v2671
    %v2710 = vpack.c.b16 %v2674, %v2673
    %v2711 = vpack.c.b16 %v2676, %v2675
    %v2712 = vpack.c.b16 %v2678, %v2677
    %v2713 = vpack.c.b16 %v2680, %v2679
    %v2714 = vpack.c.b16 %v2682, %v2681
    %2747 = vmatprep.subr.bf16.mxu0 0
    %2748 = vmatpush1.bf16.msra.mxu0 %v2683
    %2749 = vmatprep.subr.bf16.mxu0 0
    %2750 = vmatpush1.bf16.msra.mxu0 %v2684
    %2751 = vmatprep.subr.bf16.mxu0 0
    %2752 = vmatpush1.bf16.msra.mxu0 %v2685
    %2753 = vmatprep.subr.bf16.mxu0 0
    %2754 = vmatpush1.bf16.msra.mxu0 %v2686
    %2755 = vmatprep.subr.bf16.mxu0 0
    %2756 = vmatpush1.bf16.msra.mxu0 %v2687
    %2757 = vmatprep.subr.bf16.mxu0 0
    %2758 = vmatpush1.bf16.msra.mxu0 %v2688
    %2759 = vmatprep.subr.bf16.mxu0 0
    %2760 = vmatpush1.bf16.msra.mxu0 %v2689
    %2761 = vmatprep.subr.bf16.mxu0 0
    %2762 = vmatpush1.bf16.msra.mxu0 %v2690
    %2763 = vmatprep.subr.bf16.mxu0 0
    %2764 = vmatpush1.bf16.msra.mxu0 %v2691
    %2765 = vmatprep.subr.bf16.mxu0 0
    %2766 = vmatpush1.bf16.msra.mxu0 %v2692
    %2767 = vmatprep.subr.bf16.mxu0 0
    %2768 = vmatpush1.bf16.msra.mxu0 %v2693
    %2769 = vmatprep.subr.bf16.mxu0 0
    %2770 = vmatpush1.bf16.msra.mxu0 %v2694
    %2771 = vmatprep.subr.bf16.mxu0 0
    %2772 = vmatpush1.bf16.msra.mxu0 %v2695
    %2773 = vmatprep.subr.bf16.mxu0 0
    %2774 = vmatpush1.bf16.msra.mxu0 %v2696
    %2775 = vmatprep.subr.bf16.mxu0 0
    %2776 = vmatpush1.bf16.msra.mxu0 %v2697
    %2777 = vmatprep.subr.bf16.mxu0 0
    %2778 = vmatpush1.bf16.msra.mxu0 %v2698
    %2779 = vmatprep.mubr.bf16.mxu0 %v2481
    %2780 = vmatmul.mubr.bf16.gmra.mrb[0].mxu0 %v2480
    %v2781 = vpop.f32.mrb[0].mxu0
    %v2782 = vadd.f32 %v2553, %v2781
    %v2783 = vpop.f32.mrb[0].mxu0
    %v2784 = vpop.f32.mrb[0].mxu0
    %v2785 = vadd.f32 %v2553, %v2784
    %v2786 = vpop.f32.mrb[0].mxu0
    %2787 = vdwg.mxu0
    %2788 = vmatprep.subr.bf16.mxu0 0
    %2789 = vmatpush1.bf16.msra.mxu0 %v2699
    %2790 = vmatprep.subr.bf16.mxu0 0
    %2791 = vmatpush1.bf16.msra.mxu0 %v2700
    %2792 = vmatprep.subr.bf16.mxu0 0
    %2793 = vmatpush1.bf16.msra.mxu0 %v2701
    %2794 = vmatprep.subr.bf16.mxu0 0
    %2795 = vmatpush1.bf16.msra.mxu0 %v2702
    %2796 = vmatprep.subr.bf16.mxu0 0
    %2797 = vmatpush1.bf16.msra.mxu0 %v2703
    %2798 = vmatprep.subr.bf16.mxu0 0
    %2799 = vmatpush1.bf16.msra.mxu0 %v2704
    %2800 = vmatprep.subr.bf16.mxu0 0
    %2801 = vmatpush1.bf16.msra.mxu0 %v2705
    %2802 = vmatprep.subr.bf16.mxu0 0
    %2803 = vmatpush1.bf16.msra.mxu0 %v2706
    %2804 = vmatprep.subr.bf16.mxu0 0
    %2805 = vmatpush1.bf16.msra.mxu0 %v2707
    %2806 = vmatprep.subr.bf16.mxu0 0
    %2807 = vmatpush1.bf16.msra.mxu0 %v2708
    %2808 = vmatprep.subr.bf16.mxu0 0
    %2809 = vmatpush1.bf16.msra.mxu0 %v2709
    %2810 = vmatprep.subr.bf16.mxu0 0
    %2811 = vmatpush1.bf16.msra.mxu0 %v2710
    %2812 = vmatprep.subr.bf16.mxu0 0
    %2813 = vmatpush1.bf16.msra.mxu0 %v2711
    %2814 = vmatprep.subr.bf16.mxu0 0
    %2815 = vmatpush1.bf16.msra.mxu0 %v2712
    %2816 = vmatprep.subr.bf16.mxu0 0
    %2817 = vmatpush1.bf16.msra.mxu0 %v2713
    %2818 = vmatprep.subr.bf16.mxu0 0
    %2819 = vmatpush1.bf16.msra.mxu0 %v2714
    %2820 = vmatprep.mubr.bf16.mxu0 %v2483
    %2821 = vmatmul.mubr.bf16.gmra.mrb[0].mxu0 %v2482
    %v2822 = vpop.f32.mrb[0].mxu0
    %v2823 = vadd.f32 %v2782, %v2822
    %v2824 = vpop.f32.mrb[0].mxu0
    %v2825 = vpop.f32.mrb[0].mxu0
    %v2826 = vadd.f32 %v2785, %v2825
    %v2827 = vpop.f32.mrb[0].mxu0
    %2828 = vdwg.mxu0
    %v2829 = vpack.c.bf16 %v2826, %v2823
    %v2830 = vmin.bf16 %v2829, 1101021600
    %v2832 = vmul.bf16 %v2830, 1069105081
    %v2833 = vpow.bf16.pop %v2832
    %v2834 = vadd.bf16 %v2833, 1073758208
    %v2835 = vmul.bf16 %v2833, %v2834
    %v2836 = vadd.bf16 %v2835, 1073758208
    %v2837 = vrcp.bf16.pop %v2836
    %v2838 = vmul.bf16 %v2835, %v2837
    %v2839 = vmul.bf16 %v2829, %v2838
    %v2840 = vld [vmem:[#allocation13] sm:$0xf]
    %v2841 = vld [vmem:[#allocation13 + $0x4] sm:$0xf]
    %v2842 = vld [vmem:[#allocation13 + $0x8] sm:$0xf]
    %v2843 = vld [vmem:[#allocation13 + $0xc] sm:$0xf]
    %v2844 = vld [vmem:[#allocation13 + $0x10] sm:$0xf]
    %v2845 = vld [vmem:[#allocation13 + $0x14] sm:$0xf]
    %v2846 = vld [vmem:[#allocation13 + $0x18] sm:$0xf]
    %v2847 = vld [vmem:[#allocation13 + $0x1c] sm:$0xf]
    %v2848 = vld [vmem:[#allocation13 + $0x20] sm:$0xf]
    %v2849 = vld [vmem:[#allocation13 + $0x24] sm:$0xf]
    %v2850 = vld [vmem:[#allocation13 + $0x28] sm:$0xf]
    %v2851 = vld [vmem:[#allocation13 + $0x2c] sm:$0xf]
    %v2852 = vld [vmem:[#allocation13 + $0x30] sm:$0xf]
    %v2853 = vld [vmem:[#allocation13 + $0x34] sm:$0xf]
    %v2854 = vld [vmem:[#allocation13 + $0x38] sm:$0xf]
    %v2855 = vld [vmem:[#allocation13 + $0x3c] sm:$0xf]
    %v2856 = vld [vmem:[%s10] sm:$0x1]
    %v2858 = vlaneseq
    %v2859 = vshrl.u32 %v2858, 7
    %v2860 = vsub.s32 0, %v2859
    %v2861 = vrot.slane %v2856, %v2860
    %v2879 = vunpack.c.l.b16 %v2840
    %v2880 = vunpack.c.l.b16 %v2841
    %v2881 = vunpack.c.l.b16 %v2842
    %v2882 = vunpack.c.l.b16 %v2843
    %v2883 = vunpack.c.l.b16 %v2844
    %v2884 = vunpack.c.l.b16 %v2845
    %v2885 = vunpack.c.l.b16 %v2846
    %v2886 = vunpack.c.l.b16 %v2847
    %v2887 = vunpack.c.l.b16 %v2848
    %v2888 = vunpack.c.l.b16 %v2849
    %v2889 = vunpack.c.l.b16 %v2850
    %v2890 = vunpack.c.l.b16 %v2851
    %v2891 = vunpack.c.l.b16 %v2852
    %v2892 = vunpack.c.l.b16 %v2853
    %v2893 = vunpack.c.l.b16 %v2854
    %v2894 = vunpack.c.l.b16 %v2855
    %v2895 = vpack.c.b16 %v2880, %v2879
    %v2896 = vpack.c.b16 %v2882, %v2881
    %v2897 = vpack.c.b16 %v2884, %v2883
    %v2898 = vpack.c.b16 %v2886, %v2885
    %v2899 = vpack.c.b16 %v2888, %v2887
    %v2900 = vpack.c.b16 %v2890, %v2889
    %v2901 = vpack.c.b16 %v2892, %v2891
    %v2902 = vpack.c.b16 %v2894, %v2893
    %2911 = vmatprep.subr.bf16.mxu0 0
    %2912 = vmatpush1.bf16.msra.mxu0 %v2895
    %2913 = vmatprep.subr.bf16.mxu0 0
    %2914 = vmatpush1.bf16.msra.mxu0 %v2896
    %2915 = vmatprep.subr.bf16.mxu0 0
    %2916 = vmatpush1.bf16.msra.mxu0 %v2897
    %2917 = vmatprep.subr.bf16.mxu0 0
    %2918 = vmatpush1.bf16.msra.mxu0 %v2898
    %2919 = vmatprep.subr.bf16.mxu0 0
    %2920 = vmatpush1.bf16.msra.mxu0 %v2899
    %2921 = vmatprep.subr.bf16.mxu0 0
    %2922 = vmatpush1.bf16.msra.mxu0 %v2900
    %2923 = vmatprep.subr.bf16.mxu0 0
    %2924 = vmatpush1.bf16.msra.mxu0 %v2901
    %2925 = vmatprep.subr.bf16.mxu0 0
    %2926 = vmatpush1.bf16.msra.mxu0 %v2902
    %2927 = vmatprep.subr.bf16.mxu0 0
    %2928 = vmatpush1.bf16.msra.mxu0 0
    %2929 = vmatprep.subr.bf16.mxu0 0
    %2930 = vmatpush1.bf16.msra.mxu0 0
    %2931 = vmatprep.subr.bf16.mxu0 0
    %2932 = vmatpush1.bf16.msra.mxu0 0
    %2933 = vmatprep.subr.bf16.mxu0 0
    %2934 = vmatpush1.bf16.msra.mxu0 0
    %2935 = vmatprep.subr.bf16.mxu0 0
    %2936 = vmatpush1.bf16.msra.mxu0 0
    %2937 = vmatprep.subr.bf16.mxu0 0
    %2938 = vmatpush1.bf16.msra.mxu0 0
    %2939 = vmatprep.subr.bf16.mxu0 0
    %2940 = vmatpush1.bf16.msra.mxu0 0
    %2941 = vmatprep.subr.bf16.mxu0 0
    %2942 = vmatpush1.bf16.msra.mxu0 0
    %2943 = vmatprep.mubr.bf16.mxu0 0
    %2944 = vmatmul.mubr.bf16.gmra.mrb[0].mxu0 %v2839
    %v2945 = vpop.f32.mrb[0].mxu0
    %v2946 = vadd.f32 %v2861, %v2945
    %v2947 = vpop.f32.mrb[0].mxu0
    %v2948 = vpop.f32.mrb[0].mxu0
    %v2949 = vadd.f32 %v2861, %v2948
    %v2950 = vpop.f32.mrb[0].mxu0
    %2951 = vdwg.mxu0
    %v2952 = vpack.c.bf16 %v2949, %v2946
    %v2954 = vunpack.c.l.b16 %v2952
    %v2955 = vunpack.c.h.b16 %v2952
    %v2956 = vpack.c.b16 %v2954, %v2954
    %v2957 = vpack.c.b16 %v2955, %v2955
    %2960 = vst [vmem:[#allocation15] sm:$0xf] %v2956
    %2961 = vst [vmem:[#allocation15 + $0x4] sm:$0xf] %v2957
    %s2962 = sld [smem:[#allocation3]]
    %s2963 = smul.u32 0, 16
    %v2964 = vlaneseq
    %v2965 = vshrl.u32 %v2964, 7
    %v2966 = vadd.s32 %v2965, 8
    %v2967 = vstv %s2963
    %v2968 = vadd.s32 %v2967, %v2965
    %v2969 = vadd.s32 %v2967, %v2966
    %v2970 = vld [vmem:[#allocation7] sm:$0xf]
    %v2971 = vld [vmem:[#allocation7 + $0x4] sm:$0xf]
    %v2972 = vunpack.c.l.bf16 %v2970
    %v2973 = vunpack.c.l.bf16 %v2971
    %v2974 = vsub.f32 %v2946, %v2972
    %v2975 = vsub.f32 %v2949, %v2973
    %v2976 = vstv %s2962
    %vm2977 = vcmp.lt.s32.totalorder %v2968, %v2976
    %vm2978 = vcmp.lt.s32.totalorder %v2969, %v2976
    %v2979 = vmul.f32 %v2974, %v2974
    %v2980 = vmul.f32 %v2975, %v2975
    %v2981 = vsel %vm2977, %v2979, 0.0
    %v2982 = vsel %vm2978, %v2980, 0.0
    %v2983 = vadd.f32 %v2981, %v2982
    %v2984 = vrot.slane %v2983, 4
    %v2985 = vadd.f32 %v2983, %v2984
    %v2986 = vrot.slane %v2985, 2
    %v2987 = vadd.f32 %v2985, %v2986
    %v2988 = vrot.slane %v2987, 1
    %v2989 = vadd.f32 %v2987, %v2988
    %vm2990 = vcmp.eq.s32.totalorder %v2965, 0
    %v2991 = vsel %vm2990, %v2989, 0.0
    %2992 = vst [vmem:[#allocation16] sm:$0xff] %v2991
    // Predicated region
    $region66: #{tpu_custom_call.1} parent=1 // pred_check
      _
    $region67: #{tpu_custom_call.1} parent=1 // pred_check_branch
      %2994 = sbr.rel (0) target = $region69
    $region68: #{tpu_custom_call.1} parent=1 // pred_region
      %s2996 = ssub.s32 128, 128
      %2997 = vsyncadd [#allocation6], %s2996
      %s2998 = sshll.u32 [#allocation15], 4
      %s2999 = int_to_ptr.vmem [resolvable:$true] %s2998
      %3004 = dma.vmem_to_hbm [thread:$0]  %s2999, 128, %s11, [#allocation6], 64, 64, 4
    $region69: #{tpu_custom_call.1} parent=1 // pred_fallthru
      _
    // Predicated region
    $region70: #{tpu_custom_call.1} parent=1 // pred_check
      _
    $region71: #{tpu_custom_call.1} parent=1 // pred_check_branch
      %3006 = sbr.rel (0) target = $region73
    $region72: #{tpu_custom_call.1} parent=1 // pred_region
      %s3008 = ssub.s32 128, 128
      %3009 = vsyncadd [#allocation17], %s3008
      %s3011 = sshll.u32 [#allocation16], 4
      %s3012 = int_to_ptr.vmem [resolvable:$true] %s3011
      %3014 = dma.vmem_to_hbm [thread:$0]  %s3012, 128, %s12, [#allocation17]
    $region73: #{tpu_custom_call.1} parent=1 // pred_fallthru
      _
    // Predicated region
    $region74: #{tpu_custom_call.1} parent=1 // pred_check
      _
    $region75: #{tpu_custom_call.1} parent=1 // pred_check_branch
      %3016 = sbr.rel (0) target = $region77
    $region76: #{tpu_custom_call.1} parent=1 // pred_region
      %3017 = dma.done [#allocation6], 128
    $region77: #{tpu_custom_call.1} parent=1 // pred_fallthru
      _
    // Predicated region
    $region78: #{tpu_custom_call.1} parent=1 // pred_check
      _
    $region79: #{tpu_custom_call.1} parent=1 // pred_check_branch
      %3019 = sbr.rel (0) target = $region81
    $region80: #{tpu_custom_call.1} parent=1 // pred_region
      %3020 = dma.done [#allocation17], 128
    $region81: #{tpu_custom_call.1} parent=1 // pred_fallthru
      _
    %3021 = vsyncpa [#allocation5], 1
    %3022 = vsyncpa [#allocation8], 1
    %3023 = vsyncpa [#allocation11], 1
    %3024 = vsyncpa [#allocation14], 1
    %3025 = vsyncpa [#allocation6], 1
    %3026 = vsyncpa [#allocation17], 1

</llo_original>
